<compile_context>
chip_gen: v7x
topology: tpu7x:2x2x1
jax: 0.10.0
libtpu: 0.0.40
codegen_flags: <defaults>
</compile_context>

<pallas_src>
import jax
import jax.numpy as jnp
from jax.experimental import pallas as pl
from jax.experimental.pallas import tpu as pltpu

N_HIDDEN = 32
N_PREBLEACH = 10
N_POSTBLEACH = 100
SEQ_LEN = 110
PAD_SEQ = 128          # lane-aligned padded input width
OUT_SIZE = 3
OUT_PAD = 128          # lane-aligned padded output width
MAX_TB = 2048          # VMEM-safe on every generation (v5e scoped default)


def _round_up(n, m):
    return ((n + m - 1) // m) * m


# --------------------------------------------------------------------------
# Kernel
# --------------------------------------------------------------------------
def split_mlp_kernel(x_ref, w_in_ref, w_mid_ref, w_down_ref, w_merge_ref,
                     w_out_ref, b_in_ref, b256_ref, b64_ref, b_out_ref,
                     out_ref):
    f32 = jnp.float32
    bf16 = jnp.bfloat16

    x = x_ref[...]                       # (TB, 128) bf16
    b256 = b256_ref[...]                 # (5, 256) bf16
    b64 = b64_ref[...]                   # (3, 64)  bf16

    def dense(h_bf16, w_bf16, b_bf16):
        # MXU accumulates in f32; epilogue (bias + ReLU) runs in bf16.
        y = jnp.dot(h_bf16, w_bf16, preferred_element_type=f32)
        return jnp.maximum(y.astype(bf16) + b_bf16, 0)

    # ---- merged first layer: one K=128 pass feeds both branches ----
    y0 = jnp.dot(x, w_in_ref[...], preferred_element_type=f32)     # (TB, 512)
    y0 = jnp.maximum(y0.astype(bf16) + b_in_ref[...], 0)           # bf16
    h = y0[:, :256]                      # prebleach branch input
    g = y0[:, 256:]                      # postbleach branch input

    # ---- prebleach branch ----
    h = dense(h, w_mid_ref[0], b256[0:1, :])
    h = dense(h, w_mid_ref[1], b256[1:2, :])
    h = dense(h, w_down_ref[0], b64[0:1, :])                       # (TB, 64)

    # ---- postbleach branch ----
    g = dense(g, w_mid_ref[2], b256[2:3, :])
    g = dense(g, w_mid_ref[3], b256[3:4, :])
    g = dense(g, w_down_ref[1], b64[1:2, :])                       # (TB, 64)

    # ---- head: folded branch-final linears, fused K=128 merge matmul ----
    hg = jnp.concatenate([h, g], axis=-1)                          # (TB, 128)
    z = dense(hg, w_merge_ref[...], b256[4:5, :])                  # (TB, 256)
    z = dense(z, w_down_ref[2], b64[2:3, :])                       # (TB, 64)

    out = (jnp.dot(z, w_out_ref[...], preferred_element_type=f32)
           + b_out_ref[...])                                       # (TB, 128)
    out_ref[...] = out.astype(out_ref.dtype)


# --------------------------------------------------------------------------
# Parameter construction / packing
# --------------------------------------------------------------------------
def _init_linear(key, fan_in, fan_out):
    """PyTorch-style default init: U(-1/sqrt(fan_in), 1/sqrt(fan_in)).

    Returns W as (in, out) (already transposed) and b as (1, out), both f32.
    """
    kw, kb = jax.random.split(key)
    bound = 1.0 / (fan_in ** 0.5)
    w = jax.random.uniform(kw, (fan_in, fan_out), jnp.float32, -bound, bound)
    b = jax.random.uniform(kb, (1, fan_out), jnp.float32, -bound, bound)
    return w, b


def make_split_params(key, n_hidden=N_HIDDEN):
    """Raw per-layer params matching the PyTorch module (13 Linear layers)."""
    h8, h2, h1 = 8 * n_hidden, 2 * n_hidden, n_hidden
    shapes = [
        (N_PREBLEACH, h8), (h8, h8), (h8, h8), (h8, h2), (h2, h1),     # prebleach
        (N_POSTBLEACH, h8), (h8, h8), (h8, h8), (h8, h2), (h2, h2),    # postbleach
        (3 * n_hidden, h8), (h8, h2), (h2, OUT_SIZE),                  # head
    ]
    keys = jax.random.split(key, len(shapes))
    params = []
    for k, (fi, fo) in zip(keys, shapes):
        params.extend(_init_linear(k, fi, fo))
    return tuple(params)


def prepare_split_params(raw, weight_dtype=jnp.bfloat16):
    """Fold / pad / pack the raw params into the 9 kernel operands."""
    (pw1, pb1, pw2, pb2, pw3, pb3, pw4, pb4, pw5, pb5,
     qw1, qb1, qw2, qb2, qw3, qb3, qw4, qb4, qw5, qb5,
     hw1, hb1, hw2, hb2, hw3, hb3) = raw

    h1 = pw5.shape[1]                       # 32
    hwa, hwb = hw1[:h1, :], hw1[h1:, :]     # (32,256), (64,256)

    # Fold branch-final linears (no ReLU after them) into the head's 1st layer.
    pwA = pw5 @ hwa                                         # (64, 256)
    qwB = qw5 @ hwb                                         # (64, 256)
    hb1p = hb1 + pb5 @ hwa + qb5 @ hwb                      # (1, 256)

    # Single packed first layer: input padded to 128, both branches side by side.
    w_in = jnp.zeros((PAD_SEQ, 512), jnp.float32)
    w_in = w_in.at[:N_PREBLEACH, :256].set(pw1)
    w_in = w_in.at[N_PREBLEACH:SEQ_LEN, 256:].set(qw1)
    w_in = w_in.astype(weight_dtype)                               # (128, 512)
    b_in = jnp.concatenate([pb1, qb1], axis=1).astype(weight_dtype)  # (1, 512)

    w_mid = jnp.stack([pw2, pw3, qw2, qw3]).astype(weight_dtype)   # (4, 256, 256)
    w_down = jnp.stack([pw4, qw4, hw2]).astype(weight_dtype)       # (3, 256, 64)
    # Fused merge: vertical stack, fed by lane-concat of the branch outputs.
    w_merge = jnp.concatenate([pwA, qwB], axis=0).astype(weight_dtype)  # (128, 256)

    # Output padded to 128 lanes for dense, unmasked writeback.
    w_out = jnp.zeros((hw3.shape[0], OUT_PAD), jnp.float32)
    w_out = w_out.at[:, :OUT_SIZE].set(hw3).astype(weight_dtype)   # (64, 128)
    b_out = jnp.zeros((1, OUT_PAD), jnp.float32).at[:, :OUT_SIZE].set(hb3)

    b256 = jnp.concatenate([pb2, pb3, qb2, qb3, hb1p],
                           axis=0).astype(weight_dtype)            # (5, 256)
    b64 = jnp.concatenate([pb4, qb4, hb2], axis=0).astype(weight_dtype)  # (3, 64)
    return (w_in, w_mid, w_down, w_merge, w_out, b_in, b256, b64, b_out)


# --------------------------------------------------------------------------
# Wrapper
# --------------------------------------------------------------------------
def _choose_tile(B, tb):
    """Clamp tb and pick an (even, >=2 when possible) batch-grid step count."""
    tb = max(8, min(int(tb), MAX_TB))
    tb = _round_up(tb, 8)
    # Ensure >= 2 grid steps when the batch allows (v7x megacore sharding).
    half = _round_up((B + 1) // 2, 8)
    tb = min(tb, max(half, 8))
    n_steps = -(-B // tb)
    # Prefer an even step count so neither TensorCore strands on a tail step.
    if n_steps > 1 and n_steps % 2 == 1:
        n_steps += 1
        tb = _round_up(-(-B // n_steps), 8)
    n_steps = max(n_steps, 1)
    return tb, n_steps


def split_forward(x, prepared, tb=MAX_TB):
    """x: (B, 1, 110) float32 -> (B, 3) float32."""
    B = x.shape[0]
    tb, n_steps = _choose_tile(B, tb)
    B_pad = tb * n_steps

    # bf16 input, feature dim zero-padded 110 -> 128 (dense lane-aligned DMA).
    x2 = jnp.reshape(x, (B, SEQ_LEN)).astype(jnp.bfloat16)
    x2 = jnp.pad(x2, ((0, B_pad - B), (0, PAD_SEQ - SEQ_LEN)))

    w_in, w_mid, w_down, w_merge, w_out, b_in, b256, b64, b_out = prepared

    def const_spec(shape):
        return pl.BlockSpec(shape, lambda i, _s=len(shape): (0,) * _s)

    n_weight = sum(int(a.size) for a in (w_in, w_mid, w_down, w_merge, w_out))
    param_bytes = sum(int(a.size) * a.dtype.itemsize for a in prepared)
    cost = pl.CostEstimate(
        flops=2 * B_pad * n_weight,
        transcendentals=0,
        bytes_accessed=B_pad * (PAD_SEQ * 2 + OUT_PAD * 4) + param_bytes,
    )

    out = pl.pallas_call(
        split_mlp_kernel,
        grid=(n_steps,),
        in_specs=[
            pl.BlockSpec((tb, PAD_SEQ), lambda i: (i, 0)),
            const_spec(w_in.shape),
            const_spec(w_mid.shape),
            const_spec(w_down.shape),
            const_spec(w_merge.shape),
            const_spec(w_out.shape),
            const_spec(b_in.shape),
            const_spec(b256.shape),
            const_spec(b64.shape),
            const_spec(b_out.shape),
        ],
        out_specs=pl.BlockSpec((tb, OUT_PAD), lambda i: (i, 0)),
        out_shape=jax.ShapeDtypeStruct((B_pad, OUT_PAD), jnp.float32),
        compiler_params=pltpu.CompilerParams(
            dimension_semantics=("parallel",),
            vmem_limit_bytes=32 * 1024 * 1024),
        cost_estimate=cost,
    )(x2, *prepared)
    return out[:B, :OUT_SIZE]


# --------------------------------------------------------------------------
# References
# --------------------------------------------------------------------------
def split_forward_ref(x, prepared):
    """Pure-JAX reference mirroring the kernel math (bf16 weights/epilogue)."""
    w_in, w_mid, w_down, w_merge, w_out, b_in, b256, b64, b_out = prepared
    bf16, f32 = jnp.bfloat16, jnp.float32
    x2 = jnp.reshape(x, (x.shape[0], SEQ_LEN)).astype(bf16)
    x2 = jnp.pad(x2, ((0, 0), (0, PAD_SEQ - SEQ_LEN)))

    def dense(h, w, b):
        y = jnp.dot(h, w, preferred_element_type=f32)
        return jnp.maximum(y.astype(bf16) + b, 0)

    y0 = dense(x2, w_in, b_in)
    h, g = y0[:, :256], y0[:, 256:]
    h = dense(h, w_mid[0], b256[0:1, :])
    h = dense(h, w_mid[1], b256[1:2, :])
    h = dense(h, w_down[0], b64[0:1, :])
    g = dense(g, w_mid[2], b256[2:3, :])
    g = dense(g, w_mid[3], b256[3:4, :])
    g = dense(g, w_down[1], b64[1:2, :])
    hg = jnp.concatenate([h, g], axis=-1)
    z = dense(hg, w_merge, b256[4:5, :])
    z = dense(z, w_down[2], b64[2:3, :])
    out = jnp.dot(z, w_out, preferred_element_type=f32) + b_out
    return out[:, :OUT_SIZE]


def split_forward_ref_f32(x, raw):
    """Original (unfolded, unpadded, f32) semantics of the PyTorch module."""
    (pw1, pb1, pw2, pb2, pw3, pb3, pw4, pb4, pw5, pb5,
     qw1, qb1, qw2, qb2, qw3, qb3, qw4, qb4, qw5, qb5,
     hw1, hb1, hw2, hb2, hw3, hb3) = raw
    x2 = jnp.squeeze(x, axis=1)
    pre, post = x2[:, :N_PREBLEACH], x2[:, N_PREBLEACH:SEQ_LEN]
    relu = lambda t: jnp.maximum(t, 0.0)

    h = relu(pre @ pw1 + pb1)
    h = relu(h @ pw2 + pb2)
    h = relu(h @ pw3 + pb3)
    h = relu(h @ pw4 + pb4)
    y1 = h @ pw5 + pb5

    g = relu(post @ qw1 + qb1)
    g = relu(g @ qw2 + qb2)
    g = relu(g @ qw3 + qb3)
    g = relu(g @ qw4 + qb4)
    y2 = g @ qw5 + qb5

    y = jnp.concatenate([y1, y2], axis=1)
    y = relu(y @ hw1 + hb1)
    y = relu(y @ hw2 + hb2)
    return y @ hw3 + hb3


# --------------------------------------------------------------------------
if __name__ == "__main__":
    key = jax.random.PRNGKey(0)
    k_x, k_p = jax.random.split(key)

    B = 64
    x = jax.random.normal(k_x, (B, 1, SEQ_LEN), jnp.float32)
    raw = make_split_params(k_p)
    prepared = prepare_split_params(raw)

    # Default tb=2048 is clamped to 32 here -> a 2-step parallel batch grid.
    out = jax.block_until_ready(split_forward(x, prepared))
    ref_bf16 = jax.block_until_ready(split_forward_ref(x, prepared))
    ref_f32 = jax.block_until_ready(split_forward_ref_f32(x, raw))

    assert out.shape == (B, OUT_SIZE), out.shape
    assert jnp.allclose(out, ref_bf16, atol=2e-2, rtol=2e-2), (
        f"kernel vs bf16 ref: max abs diff {jnp.max(jnp.abs(out - ref_bf16))}")
    assert jnp.allclose(out, ref_f32, atol=1.5e-1, rtol=1.5e-1), (
        f"kernel vs f32 ref: max abs diff {jnp.max(jnp.abs(out - ref_f32))}")
    print("KERNEL_OK")
</pallas_src>

<mosaic_0001>
module attributes {stable_mosaic.version = 11 : i64} {
  func.func @split_mlp_kernel(%arg0: i32, %arg1: memref<32x128xbf16, #tpu.memory_space<vmem>>, %arg2: memref<128x512xbf16, #tpu.memory_space<vmem>>, %arg3: memref<4x256x256xbf16, #tpu.memory_space<vmem>>, %arg4: memref<3x256x64xbf16, #tpu.memory_space<vmem>>, %arg5: memref<128x256xbf16, #tpu.memory_space<vmem>>, %arg6: memref<64x128xbf16, #tpu.memory_space<vmem>>, %arg7: memref<1x512xbf16, #tpu.memory_space<vmem>>, %arg8: memref<5x256xbf16, #tpu.memory_space<vmem>>, %arg9: memref<3x64xbf16, #tpu.memory_space<vmem>>, %arg10: memref<1x128xf32, #tpu.memory_space<vmem>>, %arg11: memref<32x128xf32, #tpu.memory_space<vmem>>) attributes {dimension_semantics = [#tpu.dimension_semantics<parallel>], iteration_bounds = array<i64: 2>, scalar_prefetch = 0 : i64, scratch_operands = 0 : i64, tpu.core_type = #tpu.core_type<tc>, window_params = [{transform_indices = @transform_0, window_bounds = array<i64: 32, 128>}, {pipeline_mode = #tpu.pipeline_mode<synchronous>, transform_indices = @transform_1, window_bounds = array<i64: 128, 512>}, {pipeline_mode = #tpu.pipeline_mode<synchronous>, transform_indices = @transform_2, window_bounds = array<i64: 4, 256, 256>}, {pipeline_mode = #tpu.pipeline_mode<synchronous>, transform_indices = @transform_3, window_bounds = array<i64: 3, 256, 64>}, {pipeline_mode = #tpu.pipeline_mode<synchronous>, transform_indices = @transform_4, window_bounds = array<i64: 128, 256>}, {pipeline_mode = #tpu.pipeline_mode<synchronous>, transform_indices = @transform_5, window_bounds = array<i64: 64, 128>}, {pipeline_mode = #tpu.pipeline_mode<synchronous>, transform_indices = @transform_6, window_bounds = array<i64: 1, 512>}, {pipeline_mode = #tpu.pipeline_mode<synchronous>, transform_indices = @transform_7, window_bounds = array<i64: 5, 256>}, {pipeline_mode = #tpu.pipeline_mode<synchronous>, transform_indices = @transform_8, window_bounds = array<i64: 3, 64>}, {pipeline_mode = #tpu.pipeline_mode<synchronous>, transform_indices = @transform_9, window_bounds = array<i64: 1, 128>}, {transform_indices = @transform_10, window_bounds = array<i64: 32, 128>}]} {
    %c0 = arith.constant 0 : index
    %c0_0 = arith.constant 0 : index
    %0 = vector.load %arg1[%c0, %c0_0] : memref<32x128xbf16, #tpu.memory_space<vmem>>, vector<32x128xbf16>
    %c0_1 = arith.constant 0 : index
    %c0_2 = arith.constant 0 : index
    %1 = vector.load %arg8[%c0_1, %c0_2] : memref<5x256xbf16, #tpu.memory_space<vmem>>, vector<5x256xbf16>
    %c0_3 = arith.constant 0 : index
    %c0_4 = arith.constant 0 : index
    %2 = vector.load %arg9[%c0_3, %c0_4] : memref<3x64xbf16, #tpu.memory_space<vmem>>, vector<3x64xbf16>
    %c0_5 = arith.constant 0 : index
    %c0_6 = arith.constant 0 : index
    %3 = vector.load %arg2[%c0_5, %c0_6] : memref<128x512xbf16, #tpu.memory_space<vmem>>, vector<128x512xbf16>
    %cst = arith.constant dense<0.000000e+00> : vector<32x512xf32>
    %4 = tpu.matmul %0, %3, %cst {dimension_numbers = #tpu.dot_dimension_numbers<[1], [0], [0], [1], [0, 0, 1, 1], [], []>} : vector<32x128xbf16>, vector<128x512xbf16>, vector<32x512xf32> -> vector<32x512xf32>
    %5 = arith.truncf %4 : vector<32x512xf32> to vector<32x512xbf16>
    %c0_7 = arith.constant 0 : index
    %c0_8 = arith.constant 0 : index
    %6 = vector.load %arg7[%c0_7, %c0_8] : memref<1x512xbf16, #tpu.memory_space<vmem>>, vector<1x512xbf16>
    %7 = vector.broadcast %6 : vector<1x512xbf16> to vector<32x512xbf16>
    %8 = arith.addf %5, %7 : vector<32x512xbf16>
    %cst_9 = arith.constant 0.000000e+00 : bf16
    %9 = vector.broadcast %cst_9 : bf16 to vector<32x512xbf16>
    %10 = arith.maximumf %8, %9 : vector<32x512xbf16>
    %11 = vector.extract_strided_slice %10 {offsets = [0, 0], sizes = [32, 256], strides = [1, 1]} : vector<32x512xbf16> to vector<32x256xbf16>
    %12 = vector.extract_strided_slice %10 {offsets = [0, 256], sizes = [32, 256], strides = [1, 1]} : vector<32x512xbf16> to vector<32x256xbf16>
    %c0_10 = arith.constant 0 : index
    %c0_11 = arith.constant 0 : index
    %c0_12 = arith.constant 0 : index
    %13 = vector.load %arg3[%c0_10, %c0_11, %c0_12] : memref<4x256x256xbf16, #tpu.memory_space<vmem>>, vector<1x256x256xbf16>
    %14 = vector.shape_cast %13 : vector<1x256x256xbf16> to vector<256x256xbf16>
    %15 = vector.extract_strided_slice %1 {offsets = [0, 0], sizes = [1, 256], strides = [1, 1]} : vector<5x256xbf16> to vector<1x256xbf16>
    %cst_13 = arith.constant dense<0.000000e+00> : vector<32x256xf32>
    %16 = tpu.matmul %11, %14, %cst_13 {dimension_numbers = #tpu.dot_dimension_numbers<[1], [0], [0], [1], [0, 0, 1, 1], [], []>} : vector<32x256xbf16>, vector<256x256xbf16>, vector<32x256xf32> -> vector<32x256xf32>
    %17 = arith.truncf %16 : vector<32x256xf32> to vector<32x256xbf16>
    %18 = vector.broadcast %15 : vector<1x256xbf16> to vector<32x256xbf16>
    %19 = arith.addf %17, %18 : vector<32x256xbf16>
    %cst_14 = arith.constant 0.000000e+00 : bf16
    %20 = vector.broadcast %cst_14 : bf16 to vector<32x256xbf16>
    %21 = arith.maximumf %19, %20 : vector<32x256xbf16>
    %c1 = arith.constant 1 : index
    %c0_15 = arith.constant 0 : index
    %c0_16 = arith.constant 0 : index
    %22 = vector.load %arg3[%c1, %c0_15, %c0_16] : memref<4x256x256xbf16, #tpu.memory_space<vmem>>, vector<1x256x256xbf16>
    %23 = vector.shape_cast %22 : vector<1x256x256xbf16> to vector<256x256xbf16>
    %24 = vector.extract_strided_slice %1 {offsets = [1, 0], sizes = [1, 256], strides = [1, 1]} : vector<5x256xbf16> to vector<1x256xbf16>
    %cst_17 = arith.constant dense<0.000000e+00> : vector<32x256xf32>
    %25 = tpu.matmul %21, %23, %cst_17 {dimension_numbers = #tpu.dot_dimension_numbers<[1], [0], [0], [1], [0, 0, 1, 1], [], []>} : vector<32x256xbf16>, vector<256x256xbf16>, vector<32x256xf32> -> vector<32x256xf32>
    %26 = arith.truncf %25 : vector<32x256xf32> to vector<32x256xbf16>
    %27 = vector.broadcast %24 : vector<1x256xbf16> to vector<32x256xbf16>
    %28 = arith.addf %26, %27 : vector<32x256xbf16>
    %cst_18 = arith.constant 0.000000e+00 : bf16
    %29 = vector.broadcast %cst_18 : bf16 to vector<32x256xbf16>
    %30 = arith.maximumf %28, %29 : vector<32x256xbf16>
    %c0_19 = arith.constant 0 : index
    %c0_20 = arith.constant 0 : index
    %c0_21 = arith.constant 0 : index
    %31 = vector.load %arg4[%c0_19, %c0_20, %c0_21] : memref<3x256x64xbf16, #tpu.memory_space<vmem>>, vector<1x256x64xbf16>
    %32 = vector.shape_cast %31 : vector<1x256x64xbf16> to vector<256x64xbf16>
    %33 = vector.extract_strided_slice %2 {offsets = [0, 0], sizes = [1, 64], strides = [1, 1]} : vector<3x64xbf16> to vector<1x64xbf16>
    %cst_22 = arith.constant dense<0.000000e+00> : vector<32x64xf32>
    %34 = tpu.matmul %30, %32, %cst_22 {dimension_numbers = #tpu.dot_dimension_numbers<[1], [0], [0], [1], [0, 0, 1, 1], [], []>} : vector<32x256xbf16>, vector<256x64xbf16>, vector<32x64xf32> -> vector<32x64xf32>
    %35 = arith.truncf %34 : vector<32x64xf32> to vector<32x64xbf16>
    %36 = vector.broadcast %33 : vector<1x64xbf16> to vector<32x64xbf16>
    %37 = arith.addf %35, %36 : vector<32x64xbf16>
    %cst_23 = arith.constant 0.000000e+00 : bf16
    %38 = vector.broadcast %cst_23 : bf16 to vector<32x64xbf16>
    %39 = arith.maximumf %37, %38 : vector<32x64xbf16>
    %c2 = arith.constant 2 : index
    %c0_24 = arith.constant 0 : index
    %c0_25 = arith.constant 0 : index
    %40 = vector.load %arg3[%c2, %c0_24, %c0_25] : memref<4x256x256xbf16, #tpu.memory_space<vmem>>, vector<1x256x256xbf16>
    %41 = vector.shape_cast %40 : vector<1x256x256xbf16> to vector<256x256xbf16>
    %42 = vector.extract_strided_slice %1 {offsets = [2, 0], sizes = [1, 256], strides = [1, 1]} : vector<5x256xbf16> to vector<1x256xbf16>
    %cst_26 = arith.constant dense<0.000000e+00> : vector<32x256xf32>
    %43 = tpu.matmul %12, %41, %cst_26 {dimension_numbers = #tpu.dot_dimension_numbers<[1], [0], [0], [1], [0, 0, 1, 1], [], []>} : vector<32x256xbf16>, vector<256x256xbf16>, vector<32x256xf32> -> vector<32x256xf32>
    %44 = arith.truncf %43 : vector<32x256xf32> to vector<32x256xbf16>
    %45 = vector.broadcast %42 : vector<1x256xbf16> to vector<32x256xbf16>
    %46 = arith.addf %44, %45 : vector<32x256xbf16>
    %cst_27 = arith.constant 0.000000e+00 : bf16
    %47 = vector.broadcast %cst_27 : bf16 to vector<32x256xbf16>
    %48 = arith.maximumf %46, %47 : vector<32x256xbf16>
    %c3 = arith.constant 3 : index
    %c0_28 = arith.constant 0 : index
    %c0_29 = arith.constant 0 : index
    %49 = vector.load %arg3[%c3, %c0_28, %c0_29] : memref<4x256x256xbf16, #tpu.memory_space<vmem>>, vector<1x256x256xbf16>
    %50 = vector.shape_cast %49 : vector<1x256x256xbf16> to vector<256x256xbf16>
    %51 = vector.extract_strided_slice %1 {offsets = [3, 0], sizes = [1, 256], strides = [1, 1]} : vector<5x256xbf16> to vector<1x256xbf16>
    %cst_30 = arith.constant dense<0.000000e+00> : vector<32x256xf32>
    %52 = tpu.matmul %48, %50, %cst_30 {dimension_numbers = #tpu.dot_dimension_numbers<[1], [0], [0], [1], [0, 0, 1, 1], [], []>} : vector<32x256xbf16>, vector<256x256xbf16>, vector<32x256xf32> -> vector<32x256xf32>
    %53 = arith.truncf %52 : vector<32x256xf32> to vector<32x256xbf16>
    %54 = vector.broadcast %51 : vector<1x256xbf16> to vector<32x256xbf16>
    %55 = arith.addf %53, %54 : vector<32x256xbf16>
    %cst_31 = arith.constant 0.000000e+00 : bf16
    %56 = vector.broadcast %cst_31 : bf16 to vector<32x256xbf16>
    %57 = arith.maximumf %55, %56 : vector<32x256xbf16>
    %c1_32 = arith.constant 1 : index
    %c0_33 = arith.constant 0 : index
    %c0_34 = arith.constant 0 : index
    %58 = vector.load %arg4[%c1_32, %c0_33, %c0_34] : memref<3x256x64xbf16, #tpu.memory_space<vmem>>, vector<1x256x64xbf16>
    %59 = vector.shape_cast %58 : vector<1x256x64xbf16> to vector<256x64xbf16>
    %60 = vector.extract_strided_slice %2 {offsets = [1, 0], sizes = [1, 64], strides = [1, 1]} : vector<3x64xbf16> to vector<1x64xbf16>
    %cst_35 = arith.constant dense<0.000000e+00> : vector<32x64xf32>
    %61 = tpu.matmul %57, %59, %cst_35 {dimension_numbers = #tpu.dot_dimension_numbers<[1], [0], [0], [1], [0, 0, 1, 1], [], []>} : vector<32x256xbf16>, vector<256x64xbf16>, vector<32x64xf32> -> vector<32x64xf32>
    %62 = arith.truncf %61 : vector<32x64xf32> to vector<32x64xbf16>
    %63 = vector.broadcast %60 : vector<1x64xbf16> to vector<32x64xbf16>
    %64 = arith.addf %62, %63 : vector<32x64xbf16>
    %cst_36 = arith.constant 0.000000e+00 : bf16
    %65 = vector.broadcast %cst_36 : bf16 to vector<32x64xbf16>
    %66 = arith.maximumf %64, %65 : vector<32x64xbf16>
    %67 = tpu.concatenate %39, %66 in 1 : vector<32x64xbf16>, vector<32x64xbf16> -> vector<32x128xbf16>
    %c0_37 = arith.constant 0 : index
    %c0_38 = arith.constant 0 : index
    %68 = vector.load %arg5[%c0_37, %c0_38] : memref<128x256xbf16, #tpu.memory_space<vmem>>, vector<128x256xbf16>
    %69 = vector.extract_strided_slice %1 {offsets = [4, 0], sizes = [1, 256], strides = [1, 1]} : vector<5x256xbf16> to vector<1x256xbf16>
    %cst_39 = arith.constant dense<0.000000e+00> : vector<32x256xf32>
    %70 = tpu.matmul %67, %68, %cst_39 {dimension_numbers = #tpu.dot_dimension_numbers<[1], [0], [0], [1], [0, 0, 1, 1], [], []>} : vector<32x128xbf16>, vector<128x256xbf16>, vector<32x256xf32> -> vector<32x256xf32>
    %71 = arith.truncf %70 : vector<32x256xf32> to vector<32x256xbf16>
    %72 = vector.broadcast %69 : vector<1x256xbf16> to vector<32x256xbf16>
    %73 = arith.addf %71, %72 : vector<32x256xbf16>
    %cst_40 = arith.constant 0.000000e+00 : bf16
    %74 = vector.broadcast %cst_40 : bf16 to vector<32x256xbf16>
    %75 = arith.maximumf %73, %74 : vector<32x256xbf16>
    %c2_41 = arith.constant 2 : index
    %c0_42 = arith.constant 0 : index
    %c0_43 = arith.constant 0 : index
    %76 = vector.load %arg4[%c2_41, %c0_42, %c0_43] : memref<3x256x64xbf16, #tpu.memory_space<vmem>>, vector<1x256x64xbf16>
    %77 = vector.shape_cast %76 : vector<1x256x64xbf16> to vector<256x64xbf16>
    %78 = vector.extract_strided_slice %2 {offsets = [2, 0], sizes = [1, 64], strides = [1, 1]} : vector<3x64xbf16> to vector<1x64xbf16>
    %cst_44 = arith.constant dense<0.000000e+00> : vector<32x64xf32>
    %79 = tpu.matmul %75, %77, %cst_44 {dimension_numbers = #tpu.dot_dimension_numbers<[1], [0], [0], [1], [0, 0, 1, 1], [], []>} : vector<32x256xbf16>, vector<256x64xbf16>, vector<32x64xf32> -> vector<32x64xf32>
    %80 = arith.truncf %79 : vector<32x64xf32> to vector<32x64xbf16>
    %81 = vector.broadcast %78 : vector<1x64xbf16> to vector<32x64xbf16>
    %82 = arith.addf %80, %81 : vector<32x64xbf16>
    %cst_45 = arith.constant 0.000000e+00 : bf16
    %83 = vector.broadcast %cst_45 : bf16 to vector<32x64xbf16>
    %84 = arith.maximumf %82, %83 : vector<32x64xbf16>
    %c0_46 = arith.constant 0 : index
    %c0_47 = arith.constant 0 : index
    %85 = vector.load %arg6[%c0_46, %c0_47] : memref<64x128xbf16, #tpu.memory_space<vmem>>, vector<64x128xbf16>
    %cst_48 = arith.constant dense<0.000000e+00> : vector<32x128xf32>
    %86 = tpu.matmul %84, %85, %cst_48 {dimension_numbers = #tpu.dot_dimension_numbers<[1], [0], [0], [1], [0, 0, 1, 1], [], []>} : vector<32x64xbf16>, vector<64x128xbf16>, vector<32x128xf32> -> vector<32x128xf32>
    %c0_49 = arith.constant 0 : index
    %c0_50 = arith.constant 0 : index
    %87 = vector.load %arg10[%c0_49, %c0_50] : memref<1x128xf32, #tpu.memory_space<vmem>>, vector<1x128xf32>
    %88 = vector.broadcast %87 : vector<1x128xf32> to vector<32x128xf32>
    %89 = arith.addf %86, %88 : vector<32x128xf32>
    %c0_51 = arith.constant 0 : index
    %c0_52 = arith.constant 0 : index
    %90 = vector.load %arg11[%c0_51, %c0_52] : memref<32x128xf32, #tpu.memory_space<vmem>>, vector<32x128xf32>
    tpu.vector_store %arg11[%c0_51, %c0_52], %89 {strides = array<i32>} : memref<32x128xf32, #tpu.memory_space<vmem>>, vector<32x128xf32>,
    return
  }
  func.func @transform_0(%arg0: i32) -> (i32, i32) {
    %c0_i32 = arith.constant 0 : i32
    %c0_i32_0 = arith.constant 0 : i32
    return %arg0, %c0_i32 : i32, i32
  }
  func.func @transform_1(%arg0: i32) -> (i32, i32) {
    %c0_i32 = arith.constant 0 : i32
    %c0_i32_0 = arith.constant 0 : i32
    %c0_i32_1 = arith.constant 0 : i32
    return %c0_i32, %c0_i32_0 : i32, i32
  }
  func.func @transform_2(%arg0: i32) -> (i32, i32, i32) {
    %c0_i32 = arith.constant 0 : i32
    %c0_i32_0 = arith.constant 0 : i32
    %c0_i32_1 = arith.constant 0 : i32
    %c0_i32_2 = arith.constant 0 : i32
    return %c0_i32, %c0_i32_0, %c0_i32_1 : i32, i32, i32
  }
  func.func @transform_3(%arg0: i32) -> (i32, i32, i32) {
    %c0_i32 = arith.constant 0 : i32
    %c0_i32_0 = arith.constant 0 : i32
    %c0_i32_1 = arith.constant 0 : i32
    %c0_i32_2 = arith.constant 0 : i32
    return %c0_i32, %c0_i32_0, %c0_i32_1 : i32, i32, i32
  }
  func.func @transform_4(%arg0: i32) -> (i32, i32) {
    %c0_i32 = arith.constant 0 : i32
    %c0_i32_0 = arith.constant 0 : i32
    %c0_i32_1 = arith.constant 0 : i32
    return %c0_i32, %c0_i32_0 : i32, i32
  }
  func.func @transform_5(%arg0: i32) -> (i32, i32) {
    %c0_i32 = arith.constant 0 : i32
    %c0_i32_0 = arith.constant 0 : i32
    %c0_i32_1 = arith.constant 0 : i32
    return %c0_i32, %c0_i32_0 : i32, i32
  }
  func.func @transform_6(%arg0: i32) -> (i32, i32) {
    %c0_i32 = arith.constant 0 : i32
    %c0_i32_0 = arith.constant 0 : i32
    %c0_i32_1 = arith.constant 0 : i32
    return %c0_i32, %c0_i32_0 : i32, i32
  }
  func.func @transform_7(%arg0: i32) -> (i32, i32) {
    %c0_i32 = arith.constant 0 : i32
    %c0_i32_0 = arith.constant 0 : i32
    %c0_i32_1 = arith.constant 0 : i32
    return %c0_i32, %c0_i32_0 : i32, i32
  }
  func.func @transform_8(%arg0: i32) -> (i32, i32) {
    %c0_i32 = arith.constant 0 : i32
    %c0_i32_0 = arith.constant 0 : i32
    %c0_i32_1 = arith.constant 0 : i32
    return %c0_i32, %c0_i32_0 : i32, i32
  }
  func.func @transform_9(%arg0: i32) -> (i32, i32) {
    %c0_i32 = arith.constant 0 : i32
    %c0_i32_0 = arith.constant 0 : i32
    %c0_i32_1 = arith.constant 0 : i32
    return %c0_i32, %c0_i32_0 : i32, i32
  }
  func.func @transform_10(%arg0: i32) -> (i32, i32) {
    %c0_i32 = arith.constant 0 : i32
    %c0_i32_0 = arith.constant 0 : i32
    return %arg0, %c0_i32 : i32, i32
  }
}

</mosaic_0001>

<llo_original>
// kernel: tpu_custom_call.1
$region0: #{tpu_custom_call.1}
  #allocation0 [shape = 'u32[]', space=smem, size = 0x4, offset = 0x4, fixed_abs, tag = 'smem constant byte address 0x4 - core index']
  #allocation1 [shape = 'u32[144,128]{1,0:T(1,128)}', space=vmem, size = 0x12000, scoped, tag = 'internal scratch']
  %s0 = inlined_call_operand.vmem [shape: bf16[64,128], index: 0, kind: input, shape index: {}]
  %s1 = inlined_call_operand.vmem [shape: bf16[128,512], index: 1, kind: input, shape index: {}]
  %s2 = inlined_call_operand.hbm [shape: bf16[4,256,256], index: 2, kind: input, shape index: {}]
  %s3 = inlined_call_operand.vmem [shape: bf16[3,256,64], index: 3, kind: input, shape index: {}]
  %s4 = inlined_call_operand.vmem [shape: bf16[128,256], index: 4, kind: input, shape index: {}]
  %s5 = inlined_call_operand.vmem [shape: bf16[64,128], index: 5, kind: input, shape index: {}]
  %s6 = inlined_call_operand.vmem [shape: bf16[1,512], index: 6, kind: input, shape index: {}]
  %s7 = inlined_call_operand.vmem [shape: bf16[5,256], index: 7, kind: input, shape index: {}]
  %s8 = inlined_call_operand.vmem [shape: bf16[3,64], index: 8, kind: input, shape index: {}]
  %s9 = inlined_call_operand.vmem [shape: f32[1,128], index: 9, kind: input, shape index: {}]
  %s10 = inlined_call_operand.hbm [shape: f32[64,128], index: 10, kind: output, shape index: {}]
  %s11 = sld [smem:[#allocation0]]
  $region77: #{tpu_custom_call.1} parent=0
    _
  %s13 = ssub.s32 1, %s11
  %s14 = scalar_select 0, %s13, %s11
  $region1: #{tpu_custom_call.1} parent=0
    #allocation2 [shape = 'u8[524288]{0}', space=vmem, size = 0x80000, scoped, tag = 'input window, operand 2, single buffered']
    #allocation3 [shape = 's32[2]{0}', space=sflag, size = 0x8, scoped, tag = 'scoped memory for tpu_custom_call.1']
    #allocation4 [shape = 's32[2]{0}', space=sflag, size = 0x8, scoped, tag = 'scoped memory for tpu_custom_call.1']
    #allocation5 [shape = 'u8[32768]{0}', space=vmem, size = 0x8000, scoped, tag = 'output window, operand 0']
    %15 = vsyncpa [#allocation3], 0
    %16 = vsyncpa [#allocation4], 0
    %s17 = scalar_lea.sflag [#allocation4], 1
    %18 = vsyncpa %s17, 0
    loop: start=0, step=1, limit=4
    $region2: #{tpu_custom_call.1} parent=1 // loop_pre_header
      _
    $region3: #{tpu_custom_call.1} parent=1 // loop_header
      %s20 = sphi 0, %s24
      %p21 = scmp.ge.s32.totalorder %s20, 4
      %s30 = sphi 0, %s32
      %s33 = sphi 0, %s30
      %s34 = sphi 0, %s33
      %s50 = sphi 0, %s34
      %s54 = sphi 0, %s54
      %s56 = sphi 0, %s54
      %s57 = sphi 0, %s56
      %s71 = sphi 0, %s57
      %s75 = sphi 0, %s75
      %s77 = sphi 0, %s75
      %s78 = sphi 0, %s77
      %s92 = sphi 0, %s78
      %s96 = sphi 0, %s96
      %s98 = sphi 0, %s96
      %s99 = sphi 0, %s98
      %s113 = sphi 0, %s99
      %s117 = sphi 0, %s117
      %s119 = sphi 0, %s117
      %s120 = sphi 0, %s119
      %s134 = sphi 0, %s120
      %s138 = sphi 0, %s138
      %s140 = sphi 0, %s138
      %s141 = sphi 0, %s140
      %s155 = sphi 0, %s141
      %s159 = sphi 0, %s159
      %s161 = sphi 0, %s159
      %s162 = sphi 0, %s161
      %s176 = sphi 0, %s162
      %s180 = sphi 0, %s180
      %s182 = sphi 0, %s180
      %s183 = sphi 0, %s182
      %s197 = sphi 0, %s183
      %s201 = sphi 0, %s201
      %s203 = sphi 0, %s201
      %s204 = sphi 0, %s203
      %s218 = sphi 0, %s204
      %s222 = sphi 0, %s222
      %s224 = sphi 0, %s222
      %s225 = sphi 0, %s224
      %s239 = sphi 0, %s225
      %s245 = sphi 0, %s247
      %s248 = sphi 0, %s245
      %s249 = sphi 0, %s248
      %s265 = sphi 0, %s249
    $region4: #{tpu_custom_call.1} parent=1 // loop_header_branch
      %23 = sbr.rel (%p21) target = $region8
    $region5: #{tpu_custom_call.1} parent=1 // loop_body
      %s25 = ssub.s32 %s20, 1
      %s26 = ssub.s32 %s20, 2
      %s27 = sadd.s32 %s20, 1
      %s28 = ssub.s32 %s20, %s27
      %p29 = scmp.eq.s32.totalorder %s28, 0
      %s31 = sadd.s32 %s30, 1
      %s32 = scalar_select %p29, %s30, %s31
      %p35 = pneg %p29
      %p36 = scmp.eq.s32.totalorder %s20, 1
      %p37 = por %p35, %p36
      %p38 = scmp.ne.s32.totalorder %s30, %s33
      %p39 = scmp.eq.s32.totalorder %s20, 0
      %p40 = por %p38, %p39
      %p41 = scmp.ne.s32.totalorder %s30, %s33
      %p42 = scmp.eq.s32.totalorder %s25, 1
      %p43 = por %p41, %p42
      %p44 = scmp.ne.s32.totalorder %s33, %s34
      %p45 = scmp.eq.s32.totalorder %s25, 0
      %p46 = por %p44, %p45
      %p47 = scmp.ne.s32.totalorder %s33, %s34
      %p48 = scmp.eq.s32.totalorder %s26, 1
      %p49 = por %p47, %p48
      %p51 = scmp.ne.s32.totalorder %s34, %s50
      %p52 = scmp.eq.s32.totalorder %s26, 0
      %p53 = por %p51, %p52
      %s55 = sadd.s32 %s54, 1
      %p58 = scmp.eq.s32.totalorder %s20, 1
      %p59 = scmp.ne.s32.totalorder %s54, %s56
      %p60 = scmp.eq.s32.totalorder %s20, 0
      %p61 = por %p59, %p60
      %p62 = scmp.ne.s32.totalorder %s54, %s56
      %p63 = scmp.eq.s32.totalorder %s25, 1
      %p64 = por %p62, %p63
      %p65 = scmp.ne.s32.totalorder %s56, %s57
      %p66 = scmp.eq.s32.totalorder %s25, 0
      %p67 = por %p65, %p66
      %p68 = scmp.ne.s32.totalorder %s56, %s57
      %p69 = scmp.eq.s32.totalorder %s26, 1
      %p70 = por %p68, %p69
      %p72 = scmp.ne.s32.totalorder %s57, %s71
      %p73 = scmp.eq.s32.totalorder %s26, 0
      %p74 = por %p72, %p73
      %s76 = sadd.s32 %s75, 1
      %p79 = scmp.eq.s32.totalorder %s20, 1
      %p80 = scmp.ne.s32.totalorder %s75, %s77
      %p81 = scmp.eq.s32.totalorder %s20, 0
      %p82 = por %p80, %p81
      %p83 = scmp.ne.s32.totalorder %s75, %s77
      %p84 = scmp.eq.s32.totalorder %s25, 1
      %p85 = por %p83, %p84
      %p86 = scmp.ne.s32.totalorder %s77, %s78
      %p87 = scmp.eq.s32.totalorder %s25, 0
      %p88 = por %p86, %p87
      %p89 = scmp.ne.s32.totalorder %s77, %s78
      %p90 = scmp.eq.s32.totalorder %s26, 1
      %p91 = por %p89, %p90
      %p93 = scmp.ne.s32.totalorder %s78, %s92
      %p94 = scmp.eq.s32.totalorder %s26, 0
      %p95 = por %p93, %p94
      %s97 = sadd.s32 %s96, 1
      %p100 = scmp.eq.s32.totalorder %s20, 1
      %p101 = scmp.ne.s32.totalorder %s96, %s98
      %p102 = scmp.eq.s32.totalorder %s20, 0
      %p103 = por %p101, %p102
      %p104 = scmp.ne.s32.totalorder %s96, %s98
      %p105 = scmp.eq.s32.totalorder %s25, 1
      %p106 = por %p104, %p105
      %p107 = scmp.ne.s32.totalorder %s98, %s99
      %p108 = scmp.eq.s32.totalorder %s25, 0
      %p109 = por %p107, %p108
      %p110 = scmp.ne.s32.totalorder %s98, %s99
      %p111 = scmp.eq.s32.totalorder %s26, 1
      %p112 = por %p110, %p111
      %p114 = scmp.ne.s32.totalorder %s99, %s113
      %p115 = scmp.eq.s32.totalorder %s26, 0
      %p116 = por %p114, %p115
      %s118 = sadd.s32 %s117, 1
      %p121 = scmp.eq.s32.totalorder %s20, 1
      %p122 = scmp.ne.s32.totalorder %s117, %s119
      %p123 = scmp.eq.s32.totalorder %s20, 0
      %p124 = por %p122, %p123
      %p125 = scmp.ne.s32.totalorder %s117, %s119
      %p126 = scmp.eq.s32.totalorder %s25, 1
      %p127 = por %p125, %p126
      %p128 = scmp.ne.s32.totalorder %s119, %s120
      %p129 = scmp.eq.s32.totalorder %s25, 0
      %p130 = por %p128, %p129
      %p131 = scmp.ne.s32.totalorder %s119, %s120
      %p132 = scmp.eq.s32.totalorder %s26, 1
      %p133 = por %p131, %p132
      %p135 = scmp.ne.s32.totalorder %s120, %s134
      %p136 = scmp.eq.s32.totalorder %s26, 0
      %p137 = por %p135, %p136
      %s139 = sadd.s32 %s138, 1
      %p142 = scmp.eq.s32.totalorder %s20, 1
      %p143 = scmp.ne.s32.totalorder %s138, %s140
      %p144 = scmp.eq.s32.totalorder %s20, 0
      %p145 = por %p143, %p144
      %p146 = scmp.ne.s32.totalorder %s138, %s140
      %p147 = scmp.eq.s32.totalorder %s25, 1
      %p148 = por %p146, %p147
      %p149 = scmp.ne.s32.totalorder %s140, %s141
      %p150 = scmp.eq.s32.totalorder %s25, 0
      %p151 = por %p149, %p150
      %p152 = scmp.ne.s32.totalorder %s140, %s141
      %p153 = scmp.eq.s32.totalorder %s26, 1
      %p154 = por %p152, %p153
      %p156 = scmp.ne.s32.totalorder %s141, %s155
      %p157 = scmp.eq.s32.totalorder %s26, 0
      %p158 = por %p156, %p157
      %s160 = sadd.s32 %s159, 1
      %p163 = scmp.eq.s32.totalorder %s20, 1
      %p164 = scmp.ne.s32.totalorder %s159, %s161
      %p165 = scmp.eq.s32.totalorder %s20, 0
      %p166 = por %p164, %p165
      %p167 = scmp.ne.s32.totalorder %s159, %s161
      %p168 = scmp.eq.s32.totalorder %s25, 1
      %p169 = por %p167, %p168
      %p170 = scmp.ne.s32.totalorder %s161, %s162
      %p171 = scmp.eq.s32.totalorder %s25, 0
      %p172 = por %p170, %p171
      %p173 = scmp.ne.s32.totalorder %s161, %s162
      %p174 = scmp.eq.s32.totalorder %s26, 1
      %p175 = por %p173, %p174
      %p177 = scmp.ne.s32.totalorder %s162, %s176
      %p178 = scmp.eq.s32.totalorder %s26, 0
      %p179 = por %p177, %p178
      %s181 = sadd.s32 %s180, 1
      %p184 = scmp.eq.s32.totalorder %s20, 1
      %p185 = scmp.ne.s32.totalorder %s180, %s182
      %p186 = scmp.eq.s32.totalorder %s20, 0
      %p187 = por %p185, %p186
      %p188 = scmp.ne.s32.totalorder %s180, %s182
      %p189 = scmp.eq.s32.totalorder %s25, 1
      %p190 = por %p188, %p189
      %p191 = scmp.ne.s32.totalorder %s182, %s183
      %p192 = scmp.eq.s32.totalorder %s25, 0
      %p193 = por %p191, %p192
      %p194 = scmp.ne.s32.totalorder %s182, %s183
      %p195 = scmp.eq.s32.totalorder %s26, 1
      %p196 = por %p194, %p195
      %p198 = scmp.ne.s32.totalorder %s183, %s197
      %p199 = scmp.eq.s32.totalorder %s26, 0
      %p200 = por %p198, %p199
      %s202 = sadd.s32 %s201, 1
      %p205 = scmp.eq.s32.totalorder %s20, 1
      %p206 = scmp.ne.s32.totalorder %s201, %s203
      %p207 = scmp.eq.s32.totalorder %s20, 0
      %p208 = por %p206, %p207
      %p209 = scmp.ne.s32.totalorder %s201, %s203
      %p210 = scmp.eq.s32.totalorder %s25, 1
      %p211 = por %p209, %p210
      %p212 = scmp.ne.s32.totalorder %s203, %s204
      %p213 = scmp.eq.s32.totalorder %s25, 0
      %p214 = por %p212, %p213
      %p215 = scmp.ne.s32.totalorder %s203, %s204
      %p216 = scmp.eq.s32.totalorder %s26, 1
      %p217 = por %p215, %p216
      %p219 = scmp.ne.s32.totalorder %s204, %s218
      %p220 = scmp.eq.s32.totalorder %s26, 0
      %p221 = por %p219, %p220
      %s223 = sadd.s32 %s222, 1
      %p226 = scmp.eq.s32.totalorder %s20, 1
      %p227 = scmp.ne.s32.totalorder %s222, %s224
      %p228 = scmp.eq.s32.totalorder %s20, 0
      %p229 = por %p227, %p228
      %p230 = scmp.ne.s32.totalorder %s222, %s224
      %p231 = scmp.eq.s32.totalorder %s25, 1
      %p232 = por %p230, %p231
      %p233 = scmp.ne.s32.totalorder %s224, %s225
      %p234 = scmp.eq.s32.totalorder %s25, 0
      %p235 = por %p233, %p234
      %p236 = scmp.ne.s32.totalorder %s224, %s225
      %p237 = scmp.eq.s32.totalorder %s26, 1
      %p238 = por %p236, %p237
      %p240 = scmp.ne.s32.totalorder %s225, %s239
      %p241 = scmp.eq.s32.totalorder %s26, 0
      %p242 = por %p240, %p241
      %s243 = ssub.s32 %s20, %s27
      %p244 = scmp.eq.s32.totalorder %s243, 0
      %s246 = sadd.s32 %s245, 1
      %s247 = scalar_select %p244, %s245, %s246
      %p250 = pneg %p244
      %p251 = scmp.eq.s32.totalorder %s20, 1
      %p252 = por %p250, %p251
      %p253 = scmp.ne.s32.totalorder %s245, %s248
      %p254 = scmp.eq.s32.totalorder %s20, 0
      %p255 = por %p253, %p254
      %p256 = scmp.ne.s32.totalorder %s245, %s248
      %p257 = scmp.eq.s32.totalorder %s25, 1
      %p258 = por %p256, %p257
      %p259 = scmp.ne.s32.totalorder %s248, %s249
      %p260 = scmp.eq.s32.totalorder %s25, 0
      %p261 = por %p259, %p260
      %p262 = scmp.ne.s32.totalorder %s248, %s249
      %p263 = scmp.eq.s32.totalorder %s26, 1
      %p264 = por %p262, %p263
      %p266 = scmp.ne.s32.totalorder %s249, %s265
      %p267 = scmp.eq.s32.totalorder %s26, 0
      %p268 = por %p266, %p267
      %p269 = scmp.le.s32.totalorder 1, %s20
      %p270 = scmp.lt.s32.totalorder %s20, 3
      %p271 = pnand %p269, %p270
      %p272 = pneg %p271
      // Predicated region
      $region9: #{tpu_custom_call.1} parent=5 // pred_check
        _
      $region10: #{tpu_custom_call.1} parent=5 // pred_check_branch
        %274 = sbr.rel (%p271) target = $region12
      $region11: #{tpu_custom_call.1} parent=5 // pred_region
        %s275 = ssub.s32 %s20, 1
        // Predicated region
        $region13: #{tpu_custom_call.1} parent=11 // pred_check
          %p276 = pneg %p67
        $region14: #{tpu_custom_call.1} parent=11 // pred_check_branch
          %278 = sbr.rel (%p276) target = $region16
        $region15: #{tpu_custom_call.1} parent=11 // pred_region
          _
        $region16: #{tpu_custom_call.1} parent=11 // pred_fallthru
          _
        // Predicated region
        $region17: #{tpu_custom_call.1} parent=11 // pred_check
          %p279 = pneg %p88
        $region18: #{tpu_custom_call.1} parent=11 // pred_check_branch
          %281 = sbr.rel (%p279) target = $region20
        $region19: #{tpu_custom_call.1} parent=11 // pred_region
          %s283 = ssub.s32 16384, 16384
          %284 = vsyncadd [#allocation3], %s283
          %s285 = sshll.u32 [#allocation2], 4
          %s286 = int_to_ptr.vmem [resolvable:$true] %s285
          %291 = dma.hbm_to_vmem [thread:$0]  %s2, 16384, %s286, [#allocation3], 128, 128, 8
        $region20: #{tpu_custom_call.1} parent=11 // pred_fallthru
          _
        // Predicated region
        $region21: #{tpu_custom_call.1} parent=11 // pred_check
          %p292 = pneg %p109
        $region22: #{tpu_custom_call.1} parent=11 // pred_check_branch
          %294 = sbr.rel (%p292) target = $region24
        $region23: #{tpu_custom_call.1} parent=11 // pred_region
          _
        $region24: #{tpu_custom_call.1} parent=11 // pred_fallthru
          _
        // Predicated region
        $region25: #{tpu_custom_call.1} parent=11 // pred_check
          %p295 = pneg %p130
        $region26: #{tpu_custom_call.1} parent=11 // pred_check_branch
          %297 = sbr.rel (%p295) target = $region28
        $region27: #{tpu_custom_call.1} parent=11 // pred_region
          _
        $region28: #{tpu_custom_call.1} parent=11 // pred_fallthru
          _
        // Predicated region
        $region29: #{tpu_custom_call.1} parent=11 // pred_check
          %p298 = pneg %p151
        $region30: #{tpu_custom_call.1} parent=11 // pred_check_branch
          %300 = sbr.rel (%p298) target = $region32
        $region31: #{tpu_custom_call.1} parent=11 // pred_region
          _
        $region32: #{tpu_custom_call.1} parent=11 // pred_fallthru
          _
        // Predicated region
        $region33: #{tpu_custom_call.1} parent=11 // pred_check
          %p301 = pneg %p172
        $region34: #{tpu_custom_call.1} parent=11 // pred_check_branch
          %303 = sbr.rel (%p301) target = $region36
        $region35: #{tpu_custom_call.1} parent=11 // pred_region
          _
        $region36: #{tpu_custom_call.1} parent=11 // pred_fallthru
          _
        // Predicated region
        $region37: #{tpu_custom_call.1} parent=11 // pred_check
          %p304 = pneg %p193
        $region38: #{tpu_custom_call.1} parent=11 // pred_check_branch
          %306 = sbr.rel (%p304) target = $region40
        $region39: #{tpu_custom_call.1} parent=11 // pred_region
          _
        $region40: #{tpu_custom_call.1} parent=11 // pred_fallthru
          _
        // Predicated region
        $region41: #{tpu_custom_call.1} parent=11 // pred_check
          %p307 = pneg %p214
        $region42: #{tpu_custom_call.1} parent=11 // pred_check_branch
          %309 = sbr.rel (%p307) target = $region44
        $region43: #{tpu_custom_call.1} parent=11 // pred_region
          _
        $region44: #{tpu_custom_call.1} parent=11 // pred_fallthru
          _
        // Predicated region
        $region45: #{tpu_custom_call.1} parent=11 // pred_check
          %p310 = pneg %p235
        $region46: #{tpu_custom_call.1} parent=11 // pred_check_branch
          %312 = sbr.rel (%p310) target = $region48
        $region47: #{tpu_custom_call.1} parent=11 // pred_region
          _
        $region48: #{tpu_custom_call.1} parent=11 // pred_fallthru
          _
      $region12: #{tpu_custom_call.1} parent=5 // pred_fallthru
        _
      %p313 = scmp.lt.s32.totalorder %s20, 2
      // Predicated region
      $region49: #{tpu_custom_call.1} parent=5 // pred_check
        %p314 = pneg %p313
      $region50: #{tpu_custom_call.1} parent=5 // pred_check_branch
        %316 = sbr.rel (%p314) target = $region52
      $region51: #{tpu_custom_call.1} parent=5 // pred_region
        // Predicated region
        $region53: #{tpu_custom_call.1} parent=51 // pred_check
          %p317 = pneg %p40
        $region54: #{tpu_custom_call.1} parent=51 // pred_check_branch
          %319 = sbr.rel (%p317) target = $region56
        $region55: #{tpu_custom_call.1} parent=51 // pred_region
          %s320 = smul.u32 4, %s20
          %p321 = scmp.lt.s32.totalorder %s320, 7
          %s322 = scalar_select %p321, %s320, 7
          %s323 = smul.addr %s322, 4
          %s324 = scalar_lea.vmem %s0, %s323
          %s325 = smul.u32 4, %s20
        $region56: #{tpu_custom_call.1} parent=51 // pred_fallthru
          _
      $region52: #{tpu_custom_call.1} parent=5 // pred_fallthru
        _
      %p326 = scmp.le.s32.totalorder 1, %s20
      %p327 = scmp.lt.s32.totalorder %s20, 3
      %p328 = pnand %p326, %p327
      %p329 = pneg %p328
      // Predicated region
      $region57: #{tpu_custom_call.1} parent=5 // pred_check
        _
      $region58: #{tpu_custom_call.1} parent=5 // pred_check_branch
        %331 = sbr.rel (%p328) target = $region60
      $region59: #{tpu_custom_call.1} parent=5 // pred_region
        %s332 = ssub.s32 %s20, 1
        // Predicated region
        $region61: #{tpu_custom_call.1} parent=59 // pred_check
          %p333 = pneg %p88
        $region62: #{tpu_custom_call.1} parent=59 // pred_check_branch
          %335 = sbr.rel (%p333) target = $region64
        $region63: #{tpu_custom_call.1} parent=59 // pred_region
          %336 = dma.done [#allocation3], 16384
        $region64: #{tpu_custom_call.1} parent=59 // pred_fallthru
          _
        %s337 = smul.u32 4, %s25
        %p338 = scmp.lt.s32.totalorder %s337, 7
        %s339 = scalar_select %p338, %s337, 7
        %s340 = smul.addr %s339, 4
        %s341 = scalar_lea.vmem %s0, %s340
        %p342 = pneg %p46
        %p343 = pneg %p43
        %p344 = pneg %p67
        %p345 = pneg %p64
        %p346 = pneg %p88
        %p347 = pneg %p85
        %p348 = pneg %p109
        %p349 = pneg %p106
        %p350 = pneg %p130
        %p351 = pneg %p127
        %p352 = pneg %p151
        %p353 = pneg %p148
        %p354 = pneg %p172
        %p355 = pneg %p169
        %p356 = pneg %p193
        %p357 = pneg %p190
        %p358 = pneg %p214
        %p359 = pneg %p211
        %p360 = pneg %p235
        %p361 = pneg %p232
        %p362 = pneg %p261
        %p363 = pneg %p258
        %s364 = sand.u32 %s248, 1
        %s365 = scalar_lea.sflag [#allocation4], %s364
        %s366 = sand.u32 %s248, 1
        %s367 = smul.addr %s366, 32
        %s368 = scalar_lea.vmem [#allocation5], %s367
        %s369 = smul.u32 4, %s25
        %p370 = scmp.lt.s32.totalorder %s369, 7
        %s371 = scalar_select %p370, %s369, 7
        %s372 = smul.addr %s371, 4
        %s373 = scalar_lea.vmem %s0, %s372
        %s374 = smul.u32 4, %s25
        %s375 = smul.u32 4, %s25
        %v377 = vld [vmem:[%s373] sm:$0xf]
        %v378 = vld [vmem:[%s373 + $0x4] sm:$0xf]
        %v379 = vld [vmem:[%s373 + $0x8] sm:$0xf]
        %v380 = vld [vmem:[%s373 + $0xc] sm:$0xf]
        %v381 = vld [vmem:[%s7] sm:$0x77]
        %v382 = vld [vmem:[%s8] sm:$0x3]
        %v383 = vld [vmem:[%s1] sm:$0xff]
        %v384 = vld [vmem:[%s1 + $0x8] sm:$0xff]
        %v385 = vld [vmem:[%s1 + $0x10] sm:$0xff]
        %v386 = vld [vmem:[%s1 + $0x18] sm:$0xff]
        %v387 = vld [vmem:[%s1 + $0x20] sm:$0xff]
        %v388 = vld [vmem:[%s1 + $0x28] sm:$0xff]
        %v389 = vld [vmem:[%s1 + $0x30] sm:$0xff]
        %v390 = vld [vmem:[%s1 + $0x38] sm:$0xff]
        %v391 = vld [vmem:[%s1 + $0x40] sm:$0xff]
        %v392 = vld [vmem:[%s1 + $0x48] sm:$0xff]
        %v393 = vld [vmem:[%s1 + $0x50] sm:$0xff]
        %v394 = vld [vmem:[%s1 + $0x58] sm:$0xff]
        %v395 = vld [vmem:[%s1 + $0x60] sm:$0xff]
        %v396 = vld [vmem:[%s1 + $0x68] sm:$0xff]
        %v397 = vld [vmem:[%s1 + $0x70] sm:$0xff]
        %v398 = vld [vmem:[%s1 + $0x78] sm:$0xff]
        %v399 = vld [vmem:[%s1 + $0x80] sm:$0xff]
        %v400 = vld [vmem:[%s1 + $0x88] sm:$0xff]
        %v401 = vld [vmem:[%s1 + $0x90] sm:$0xff]
        %v402 = vld [vmem:[%s1 + $0x98] sm:$0xff]
        %v403 = vld [vmem:[%s1 + $0xa0] sm:$0xff]
        %v404 = vld [vmem:[%s1 + $0xa8] sm:$0xff]
        %v405 = vld [vmem:[%s1 + $0xb0] sm:$0xff]
        %v406 = vld [vmem:[%s1 + $0xb8] sm:$0xff]
        %v407 = vld [vmem:[%s1 + $0xc0] sm:$0xff]
        %v408 = vld [vmem:[%s1 + $0xc8] sm:$0xff]
        %v409 = vld [vmem:[%s1 + $0xd0] sm:$0xff]
        %v410 = vld [vmem:[%s1 + $0xd8] sm:$0xff]
        %v411 = vld [vmem:[%s1 + $0xe0] sm:$0xff]
        %v412 = vld [vmem:[%s1 + $0xe8] sm:$0xff]
        %v413 = vld [vmem:[%s1 + $0xf0] sm:$0xff]
        %v414 = vld [vmem:[%s1 + $0xf8] sm:$0xff]
        %v419 = vunpack.c.l.b16 %v377
        %v420 = vunpack.c.l.b16 %v378
        %v421 = vunpack.c.l.b16 %v379
        %v422 = vunpack.c.l.b16 %v380
        %v423 = vpack.c.b16 %v420, %v419
        %v424 = vpack.c.b16 %v422, %v421
        %v459 = vunpack.c.l.b16 %v383
        %v460 = vunpack.c.h.b16 %v383
        %v461 = vunpack.c.l.b16 %v384
        %v462 = vunpack.c.h.b16 %v384
        %v463 = vunpack.c.l.b16 %v385
        %v464 = vunpack.c.h.b16 %v385
        %v465 = vunpack.c.l.b16 %v386
        %v466 = vunpack.c.h.b16 %v386
        %v467 = vunpack.c.l.b16 %v387
        %v468 = vunpack.c.h.b16 %v387
        %v469 = vunpack.c.l.b16 %v388
        %v470 = vunpack.c.h.b16 %v388
        %v471 = vunpack.c.l.b16 %v389
        %v472 = vunpack.c.h.b16 %v389
        %v473 = vunpack.c.l.b16 %v390
        %v474 = vunpack.c.h.b16 %v390
        %v475 = vunpack.c.l.b16 %v391
        %v476 = vunpack.c.h.b16 %v391
        %v477 = vunpack.c.l.b16 %v392
        %v478 = vunpack.c.h.b16 %v392
        %v479 = vunpack.c.l.b16 %v393
        %v480 = vunpack.c.h.b16 %v393
        %v481 = vunpack.c.l.b16 %v394
        %v482 = vunpack.c.h.b16 %v394
        %v483 = vunpack.c.l.b16 %v395
        %v484 = vunpack.c.h.b16 %v395
        %v485 = vunpack.c.l.b16 %v396
        %v486 = vunpack.c.h.b16 %v396
        %v487 = vunpack.c.l.b16 %v397
        %v488 = vunpack.c.h.b16 %v397
        %v489 = vunpack.c.l.b16 %v398
        %v490 = vunpack.c.h.b16 %v398
        %v491 = vunpack.c.l.b16 %v399
        %v492 = vunpack.c.h.b16 %v399
        %v493 = vunpack.c.l.b16 %v400
        %v494 = vunpack.c.h.b16 %v400
        %v495 = vunpack.c.l.b16 %v401
        %v496 = vunpack.c.h.b16 %v401
        %v497 = vunpack.c.l.b16 %v402
        %v498 = vunpack.c.h.b16 %v402
        %v499 = vunpack.c.l.b16 %v403
        %v500 = vunpack.c.h.b16 %v403
        %v501 = vunpack.c.l.b16 %v404
        %v502 = vunpack.c.h.b16 %v404
        %v503 = vunpack.c.l.b16 %v405
        %v504 = vunpack.c.h.b16 %v405
        %v505 = vunpack.c.l.b16 %v406
        %v506 = vunpack.c.h.b16 %v406
        %v507 = vunpack.c.l.b16 %v407
        %v508 = vunpack.c.h.b16 %v407
        %v509 = vunpack.c.l.b16 %v408
        %v510 = vunpack.c.h.b16 %v408
        %v511 = vunpack.c.l.b16 %v409
        %v512 = vunpack.c.h.b16 %v409
        %v513 = vunpack.c.l.b16 %v410
        %v514 = vunpack.c.h.b16 %v410
        %v515 = vunpack.c.l.b16 %v411
        %v516 = vunpack.c.h.b16 %v411
        %v517 = vunpack.c.l.b16 %v412
        %v518 = vunpack.c.h.b16 %v412
        %v519 = vunpack.c.l.b16 %v413
        %v520 = vunpack.c.h.b16 %v413
        %v521 = vunpack.c.l.b16 %v414
        %v522 = vunpack.c.h.b16 %v414
        %v523 = vpack.c.b16 %v463, %v459
        %v524 = vpack.c.b16 %v464, %v460
        %v525 = vpack.c.b16 %v465, %v461
        %v526 = vpack.c.b16 %v466, %v462
        %v527 = vpack.c.b16 %v471, %v467
        %v528 = vpack.c.b16 %v472, %v468
        %v529 = vpack.c.b16 %v473, %v469
        %v530 = vpack.c.b16 %v474, %v470
        %v531 = vpack.c.b16 %v479, %v475
        %v532 = vpack.c.b16 %v480, %v476
        %v533 = vpack.c.b16 %v481, %v477
        %v534 = vpack.c.b16 %v482, %v478
        %v535 = vpack.c.b16 %v487, %v483
        %v536 = vpack.c.b16 %v488, %v484
        %v537 = vpack.c.b16 %v489, %v485
        %v538 = vpack.c.b16 %v490, %v486
        %v539 = vpack.c.b16 %v495, %v491
        %v540 = vpack.c.b16 %v496, %v492
        %v541 = vpack.c.b16 %v497, %v493
        %v542 = vpack.c.b16 %v498, %v494
        %v543 = vpack.c.b16 %v503, %v499
        %v544 = vpack.c.b16 %v504, %v500
        %v545 = vpack.c.b16 %v505, %v501
        %v546 = vpack.c.b16 %v506, %v502
        %v547 = vpack.c.b16 %v511, %v507
        %v548 = vpack.c.b16 %v512, %v508
        %v549 = vpack.c.b16 %v513, %v509
        %v550 = vpack.c.b16 %v514, %v510
        %v551 = vpack.c.b16 %v519, %v515
        %v552 = vpack.c.b16 %v520, %v516
        %v553 = vpack.c.b16 %v521, %v517
        %v554 = vpack.c.b16 %v522, %v518
        %587 = vmatprep.subr.bf16.mxu0 %v524
        %588 = vmatpush1.bf16.msra.mxu0 %v523
        %589 = vmatprep.subr.bf16.mxu0 %v528
        %590 = vmatpush1.bf16.msra.mxu0 %v527
        %591 = vmatprep.subr.bf16.mxu0 %v532
        %592 = vmatpush1.bf16.msra.mxu0 %v531
        %593 = vmatprep.subr.bf16.mxu0 %v536
        %594 = vmatpush1.bf16.msra.mxu0 %v535
        %595 = vmatprep.subr.bf16.mxu0 %v540
        %596 = vmatpush1.bf16.msra.mxu0 %v539
        %597 = vmatprep.subr.bf16.mxu0 %v544
        %598 = vmatpush1.bf16.msra.mxu0 %v543
        %599 = vmatprep.subr.bf16.mxu0 %v548
        %600 = vmatpush1.bf16.msra.mxu0 %v547
        %601 = vmatprep.subr.bf16.mxu0 %v552
        %602 = vmatpush1.bf16.msra.mxu0 %v551
        %603 = vmatprep.subr.bf16.mxu0 0
        %604 = vmatpush1.bf16.msra.mxu0 0
        %605 = vmatprep.subr.bf16.mxu0 0
        %606 = vmatpush1.bf16.msra.mxu0 0
        %607 = vmatprep.subr.bf16.mxu0 0
        %608 = vmatpush1.bf16.msra.mxu0 0
        %609 = vmatprep.subr.bf16.mxu0 0
        %610 = vmatpush1.bf16.msra.mxu0 0
        %611 = vmatprep.subr.bf16.mxu0 0
        %612 = vmatpush1.bf16.msra.mxu0 0
        %613 = vmatprep.subr.bf16.mxu0 0
        %614 = vmatpush1.bf16.msra.mxu0 0
        %615 = vmatprep.subr.bf16.mxu0 0
        %616 = vmatpush1.bf16.msra.mxu0 0
        %617 = vmatprep.subr.bf16.mxu0 0
        %618 = vmatpush1.bf16.msra.mxu0 0
        %619 = vmatprep.mubr.bf16.mxu0 0
        %620 = vmatmul.mubr.bf16.gmra.mrb[0].mxu0 %v423
        %v621 = vpop.f32.mrb[0].mxu0
        %v622 = vadd.f32 0.0, %v621
        %v623 = vpop.f32.mrb[0].mxu0
        %v624 = vadd.f32 0.0, %v623
        %v625 = vpop.f32.mrb[0].mxu0
        %v626 = vadd.f32 0.0, %v625
        %v627 = vpop.f32.mrb[0].mxu0
        %v628 = vadd.f32 0.0, %v627
        %629 = vmatprep.mubr.bf16.mxu0 0
        %630 = vmatmul.mubr.bf16.gmra.mrb[0].mxu0 %v424
        %v631 = vpop.f32.mrb[0].mxu0
        %v632 = vadd.f32 0.0, %v631
        %v633 = vpop.f32.mrb[0].mxu0
        %v634 = vadd.f32 0.0, %v633
        %v635 = vpop.f32.mrb[0].mxu0
        %v636 = vadd.f32 0.0, %v635
        %v637 = vpop.f32.mrb[0].mxu0
        %v638 = vadd.f32 0.0, %v637
        %639 = vdwg.mxu0
        %640 = vmatprep.subr.bf16.mxu0 %v526
        %641 = vmatpush1.bf16.msra.mxu0 %v525
        %642 = vmatprep.subr.bf16.mxu0 %v530
        %643 = vmatpush1.bf16.msra.mxu0 %v529
        %644 = vmatprep.subr.bf16.mxu0 %v534
        %645 = vmatpush1.bf16.msra.mxu0 %v533
        %646 = vmatprep.subr.bf16.mxu0 %v538
        %647 = vmatpush1.bf16.msra.mxu0 %v537
        %648 = vmatprep.subr.bf16.mxu0 %v542
        %649 = vmatpush1.bf16.msra.mxu0 %v541
        %650 = vmatprep.subr.bf16.mxu0 %v546
        %651 = vmatpush1.bf16.msra.mxu0 %v545
        %652 = vmatprep.subr.bf16.mxu0 %v550
        %653 = vmatpush1.bf16.msra.mxu0 %v549
        %654 = vmatprep.subr.bf16.mxu0 %v554
        %655 = vmatpush1.bf16.msra.mxu0 %v553
        %656 = vmatprep.subr.bf16.mxu0 0
        %657 = vmatpush1.bf16.msra.mxu0 0
        %658 = vmatprep.subr.bf16.mxu0 0
        %659 = vmatpush1.bf16.msra.mxu0 0
        %660 = vmatprep.subr.bf16.mxu0 0
        %661 = vmatpush1.bf16.msra.mxu0 0
        %662 = vmatprep.subr.bf16.mxu0 0
        %663 = vmatpush1.bf16.msra.mxu0 0
        %664 = vmatprep.subr.bf16.mxu0 0
        %665 = vmatpush1.bf16.msra.mxu0 0
        %666 = vmatprep.subr.bf16.mxu0 0
        %667 = vmatpush1.bf16.msra.mxu0 0
        %668 = vmatprep.subr.bf16.mxu0 0
        %669 = vmatpush1.bf16.msra.mxu0 0
        %670 = vmatprep.subr.bf16.mxu0 0
        %671 = vmatpush1.bf16.msra.mxu0 0
        %672 = vmatprep.mubr.bf16.mxu0 0
        %673 = vmatmul.mubr.bf16.gmra.mrb[0].mxu0 %v423
        %v674 = vpop.f32.mrb[0].mxu0
        %v675 = vadd.f32 0.0, %v674
        %v676 = vpop.f32.mrb[0].mxu0
        %v677 = vadd.f32 0.0, %v676
        %v678 = vpop.f32.mrb[0].mxu0
        %v679 = vadd.f32 0.0, %v678
        %v680 = vpop.f32.mrb[0].mxu0
        %v681 = vadd.f32 0.0, %v680
        %682 = vmatprep.mubr.bf16.mxu0 0
        %683 = vmatmul.mubr.bf16.gmra.mrb[0].mxu0 %v424
        %v684 = vpop.f32.mrb[0].mxu0
        %v685 = vadd.f32 0.0, %v684
        %v686 = vpop.f32.mrb[0].mxu0
        %v687 = vadd.f32 0.0, %v686
        %v688 = vpop.f32.mrb[0].mxu0
        %v689 = vadd.f32 0.0, %v688
        %v690 = vpop.f32.mrb[0].mxu0
        %v691 = vadd.f32 0.0, %v690
        %692 = vdwg.mxu0
        %v693 = vpack.c.bf16 %v626, %v622
        %v694 = vpack.c.bf16 %v628, %v624
        %v695 = vpack.c.bf16 %v679, %v675
        %v696 = vpack.c.bf16 %v681, %v677
        %v697 = vpack.c.bf16 %v636, %v632
        %v698 = vpack.c.bf16 %v638, %v634
        %v699 = vpack.c.bf16 %v689, %v685
        %v700 = vpack.c.bf16 %v691, %v687
        %v701 = vld [vmem:[%s6] sm:$0xf]
        %v704 = vunpack.c.l.s4 1966171168
        %v705 = vunpack.c.0.s8 %v704
        %v706 = vlaneseq
        %v707 = vshrl.u32 %v706, 7
        %v708 = vsub.s32 %v705, %v707
        %v709 = vrot.slane %v701, %v708
        %v710 = vcombine.high %v709, %v709
        %v712 = vunpack.c.l.s4 1966171168
        %v713 = vunpack.c.0.s8 %v712
        %v714 = vlaneseq
        %v715 = vshrl.u32 %v714, 7
        %v716 = vsub.s32 %v713, %v715
        %v717 = vrot.slane %v709, %v716
        %v719 = vunpack.c.l.s4 1966171168
        %v720 = vunpack.c.0.s8 %v719
        %v721 = vlaneseq
        %v722 = vshrl.u32 %v721, 7
        %v723 = vsub.s32 %v720, %v722
        %v724 = vrot.slane %v710, %v723
        %v725 = vcombine.high %v717, %v717
        %v726 = vcombine.high %v724, %v724
        %v728 = vpack.i.b16 %v717, %v717
        %v730 = vlaneseq
        %v731 = vshrl.u32 %v730, 7
        %v732 = vsub.s32 0, %v731
        %v733 = vrot.slane %v728, %v732
        %v735 = vpack.i.b16 %v724, %v724
        %v737 = vlaneseq
        %v738 = vshrl.u32 %v737, 7
        %v739 = vsub.s32 0, %v738
        %v740 = vrot.slane %v735, %v739
        %v742 = vpack.i.b16 %v725, %v725
        %v744 = vlaneseq
        %v745 = vshrl.u32 %v744, 7
        %v746 = vsub.s32 0, %v745
        %v747 = vrot.slane %v742, %v746
        %v749 = vpack.i.b16 %v726, %v726
        %v751 = vlaneseq
        %v752 = vshrl.u32 %v751, 7
        %v753 = vsub.s32 0, %v752
        %v754 = vrot.slane %v749, %v753
        %v755 = vadd.bf16 %v693, %v733
        %v756 = vadd.bf16 %v694, %v740
        %v757 = vadd.bf16 %v695, %v747
        %v758 = vadd.bf16 %v696, %v754
        %v759 = vadd.bf16 %v697, %v733
        %v760 = vadd.bf16 %v698, %v740
        %v761 = vadd.bf16 %v699, %v747
        %v762 = vadd.bf16 %v700, %v754
        %v763 = vmax.bf16 %v755, 0
        %v764 = vmax.bf16 %v756, 0
        %v765 = vmax.bf16 %v757, 0
        %v766 = vmax.bf16 %v758, 0
        %v767 = vmax.bf16 %v759, 0
        %v768 = vmax.bf16 %v760, 0
        %v769 = vmax.bf16 %v761, 0
        %v770 = vmax.bf16 %v762, 0
        %v771 = vld [vmem:[#allocation2] sm:$0xff]
        %v772 = vld [vmem:[#allocation2 + $0x8] sm:$0xff]
        %v773 = vld [vmem:[#allocation2 + $0x10] sm:$0xff]
        %v774 = vld [vmem:[#allocation2 + $0x18] sm:$0xff]
        %v775 = vld [vmem:[#allocation2 + $0x20] sm:$0xff]
        %v776 = vld [vmem:[#allocation2 + $0x28] sm:$0xff]
        %v777 = vld [vmem:[#allocation2 + $0x30] sm:$0xff]
        %v778 = vld [vmem:[#allocation2 + $0x38] sm:$0xff]
        %v779 = vld [vmem:[#allocation2 + $0x40] sm:$0xff]
        %v780 = vld [vmem:[#allocation2 + $0x48] sm:$0xff]
        %v781 = vld [vmem:[#allocation2 + $0x50] sm:$0xff]
        %v782 = vld [vmem:[#allocation2 + $0x58] sm:$0xff]
        %v783 = vld [vmem:[#allocation2 + $0x60] sm:$0xff]
        %v784 = vld [vmem:[#allocation2 + $0x68] sm:$0xff]
        %v785 = vld [vmem:[#allocation2 + $0x70] sm:$0xff]
        %v786 = vld [vmem:[#allocation2 + $0x78] sm:$0xff]
        %v787 = vld [vmem:[#allocation2 + $0x80] sm:$0xff]
        %v788 = vld [vmem:[#allocation2 + $0x88] sm:$0xff]
        %v789 = vld [vmem:[#allocation2 + $0x90] sm:$0xff]
        %v790 = vld [vmem:[#allocation2 + $0x98] sm:$0xff]
        %v791 = vld [vmem:[#allocation2 + $0xa0] sm:$0xff]
        %v792 = vld [vmem:[#allocation2 + $0xa8] sm:$0xff]
        %v793 = vld [vmem:[#allocation2 + $0xb0] sm:$0xff]
        %v794 = vld [vmem:[#allocation2 + $0xb8] sm:$0xff]
        %v795 = vld [vmem:[#allocation2 + $0xc0] sm:$0xff]
        %v796 = vld [vmem:[#allocation2 + $0xc8] sm:$0xff]
        %v797 = vld [vmem:[#allocation2 + $0xd0] sm:$0xff]
        %v798 = vld [vmem:[#allocation2 + $0xd8] sm:$0xff]
        %v799 = vld [vmem:[#allocation2 + $0xe0] sm:$0xff]
        %v800 = vld [vmem:[#allocation2 + $0xe8] sm:$0xff]
        %v801 = vld [vmem:[#allocation2 + $0xf0] sm:$0xff]
        %v802 = vld [vmem:[#allocation2 + $0xf8] sm:$0xff]
        %v835 = vunpack.c.l.b16 %v771
        %v836 = vunpack.c.h.b16 %v771
        %v837 = vunpack.c.l.b16 %v772
        %v838 = vunpack.c.h.b16 %v772
        %v839 = vunpack.c.l.b16 %v773
        %v840 = vunpack.c.h.b16 %v773
        %v841 = vunpack.c.l.b16 %v774
        %v842 = vunpack.c.h.b16 %v774
        %v843 = vunpack.c.l.b16 %v775
        %v844 = vunpack.c.h.b16 %v775
        %v845 = vunpack.c.l.b16 %v776
        %v846 = vunpack.c.h.b16 %v776
        %v847 = vunpack.c.l.b16 %v777
        %v848 = vunpack.c.h.b16 %v777
        %v849 = vunpack.c.l.b16 %v778
        %v850 = vunpack.c.h.b16 %v778
        %v851 = vunpack.c.l.b16 %v779
        %v852 = vunpack.c.h.b16 %v779
        %v853 = vunpack.c.l.b16 %v780
        %v854 = vunpack.c.h.b16 %v780
        %v855 = vunpack.c.l.b16 %v781
        %v856 = vunpack.c.h.b16 %v781
        %v857 = vunpack.c.l.b16 %v782
        %v858 = vunpack.c.h.b16 %v782
        %v859 = vunpack.c.l.b16 %v783
        %v860 = vunpack.c.h.b16 %v783
        %v861 = vunpack.c.l.b16 %v784
        %v862 = vunpack.c.h.b16 %v784
        %v863 = vunpack.c.l.b16 %v785
        %v864 = vunpack.c.h.b16 %v785
        %v865 = vunpack.c.l.b16 %v786
        %v866 = vunpack.c.h.b16 %v786
        %v867 = vunpack.c.l.b16 %v787
        %v868 = vunpack.c.h.b16 %v787
        %v869 = vunpack.c.l.b16 %v788
        %v870 = vunpack.c.h.b16 %v788
        %v871 = vunpack.c.l.b16 %v789
        %v872 = vunpack.c.h.b16 %v789
        %v873 = vunpack.c.l.b16 %v790
        %v874 = vunpack.c.h.b16 %v790
        %v875 = vunpack.c.l.b16 %v791
        %v876 = vunpack.c.h.b16 %v791
        %v877 = vunpack.c.l.b16 %v792
        %v878 = vunpack.c.h.b16 %v792
        %v879 = vunpack.c.l.b16 %v793
        %v880 = vunpack.c.h.b16 %v793
        %v881 = vunpack.c.l.b16 %v794
        %v882 = vunpack.c.h.b16 %v794
        %v883 = vunpack.c.l.b16 %v795
        %v884 = vunpack.c.h.b16 %v795
        %v885 = vunpack.c.l.b16 %v796
        %v886 = vunpack.c.h.b16 %v796
        %v887 = vunpack.c.l.b16 %v797
        %v888 = vunpack.c.h.b16 %v797
        %v889 = vunpack.c.l.b16 %v798
        %v890 = vunpack.c.h.b16 %v798
        %v891 = vunpack.c.l.b16 %v799
        %v892 = vunpack.c.h.b16 %v799
        %v893 = vunpack.c.l.b16 %v800
        %v894 = vunpack.c.h.b16 %v800
        %v895 = vunpack.c.l.b16 %v801
        %v896 = vunpack.c.h.b16 %v801
        %v897 = vunpack.c.l.b16 %v802
        %v898 = vunpack.c.h.b16 %v802
        %v899 = vpack.c.b16 %v837, %v835
        %v900 = vpack.c.b16 %v838, %v836
        %v901 = vpack.c.b16 %v841, %v839
        %v902 = vpack.c.b16 %v842, %v840
        %v903 = vpack.c.b16 %v845, %v843
        %v904 = vpack.c.b16 %v846, %v844
        %v905 = vpack.c.b16 %v849, %v847
        %v906 = vpack.c.b16 %v850, %v848
        %v907 = vpack.c.b16 %v853, %v851
        %v908 = vpack.c.b16 %v854, %v852
        %v909 = vpack.c.b16 %v857, %v855
        %v910 = vpack.c.b16 %v858, %v856
        %v911 = vpack.c.b16 %v861, %v859
        %v912 = vpack.c.b16 %v862, %v860
        %v913 = vpack.c.b16 %v865, %v863
        %v914 = vpack.c.b16 %v866, %v864
        %v915 = vpack.c.b16 %v869, %v867
        %v916 = vpack.c.b16 %v870, %v868
        %v917 = vpack.c.b16 %v873, %v871
        %v918 = vpack.c.b16 %v874, %v872
        %v919 = vpack.c.b16 %v877, %v875
        %v920 = vpack.c.b16 %v878, %v876
        %v921 = vpack.c.b16 %v881, %v879
        %v922 = vpack.c.b16 %v882, %v880
        %v923 = vpack.c.b16 %v885, %v883
        %v924 = vpack.c.b16 %v886, %v884
        %v925 = vpack.c.b16 %v889, %v887
        %v926 = vpack.c.b16 %v890, %v888
        %v927 = vpack.c.b16 %v893, %v891
        %v928 = vpack.c.b16 %v894, %v892
        %v929 = vpack.c.b16 %v897, %v895
        %v930 = vpack.c.b16 %v898, %v896
        %963 = vmatprep.subr.bf16.mxu0 %v900
        %964 = vmatpush1.bf16.msra.mxu0 %v899
        %965 = vmatprep.subr.bf16.mxu0 %v902
        %966 = vmatpush1.bf16.msra.mxu0 %v901
        %967 = vmatprep.subr.bf16.mxu0 %v904
        %968 = vmatpush1.bf16.msra.mxu0 %v903
        %969 = vmatprep.subr.bf16.mxu0 %v906
        %970 = vmatpush1.bf16.msra.mxu0 %v905
        %971 = vmatprep.subr.bf16.mxu0 %v908
        %972 = vmatpush1.bf16.msra.mxu0 %v907
        %973 = vmatprep.subr.bf16.mxu0 %v910
        %974 = vmatpush1.bf16.msra.mxu0 %v909
        %975 = vmatprep.subr.bf16.mxu0 %v912
        %976 = vmatpush1.bf16.msra.mxu0 %v911
        %977 = vmatprep.subr.bf16.mxu0 %v914
        %978 = vmatpush1.bf16.msra.mxu0 %v913
        %979 = vmatprep.subr.bf16.mxu0 %v916
        %980 = vmatpush1.bf16.msra.mxu0 %v915
        %981 = vmatprep.subr.bf16.mxu0 %v918
        %982 = vmatpush1.bf16.msra.mxu0 %v917
        %983 = vmatprep.subr.bf16.mxu0 %v920
        %984 = vmatpush1.bf16.msra.mxu0 %v919
        %985 = vmatprep.subr.bf16.mxu0 %v922
        %986 = vmatpush1.bf16.msra.mxu0 %v921
        %987 = vmatprep.subr.bf16.mxu0 %v924
        %988 = vmatpush1.bf16.msra.mxu0 %v923
        %989 = vmatprep.subr.bf16.mxu0 %v926
        %990 = vmatpush1.bf16.msra.mxu0 %v925
        %991 = vmatprep.subr.bf16.mxu0 %v928
        %992 = vmatpush1.bf16.msra.mxu0 %v927
        %993 = vmatprep.subr.bf16.mxu0 %v930
        %994 = vmatpush1.bf16.msra.mxu0 %v929
        %995 = vmatprep.mubr.bf16.mxu0 %v764
        %996 = vmatmul.mubr.bf16.gmra.mrb[0].mxu0 %v763
        %v997 = vpop.f32.mrb[0].mxu0
        %v998 = vadd.f32 0.0, %v997
        %v999 = vpop.f32.mrb[0].mxu0
        %v1000 = vadd.f32 0.0, %v999
        %v1001 = vpop.f32.mrb[0].mxu0
        %v1002 = vadd.f32 0.0, %v1001
        %v1003 = vpop.f32.mrb[0].mxu0
        %v1004 = vadd.f32 0.0, %v1003
        %1005 = vmatprep.mubr.bf16.mxu0 %v768
        %1006 = vmatmul.mubr.bf16.gmra.mrb[0].mxu0 %v767
        %v1007 = vpop.f32.mrb[0].mxu0
        %v1008 = vadd.f32 0.0, %v1007
        %v1009 = vpop.f32.mrb[0].mxu0
        %v1010 = vadd.f32 0.0, %v1009
        %v1011 = vpop.f32.mrb[0].mxu0
        %v1012 = vadd.f32 0.0, %v1011
        %v1013 = vpop.f32.mrb[0].mxu0
        %v1014 = vadd.f32 0.0, %v1013
        %1015 = vdwg.mxu0
        %v1016 = vpack.c.bf16 %v1002, %v998
        %v1017 = vpack.c.bf16 %v1004, %v1000
        %v1018 = vpack.c.bf16 %v1012, %v1008
        %v1019 = vpack.c.bf16 %v1014, %v1010
        %v1021 = vunpack.c.l.b16 %v381
        %v1022 = vunpack.c.h.b16 %v381
        %v1023 = vpack.c.b16 %v1021, %v1021
        %v1024 = vpack.c.b16 %v1022, %v1022
        %v1026 = vpack.i.b16 %v1023, %v1023
        %v1028 = vlaneseq
        %v1029 = vshrl.u32 %v1028, 7
        %v1030 = vsub.s32 0, %v1029
        %v1031 = vrot.slane %v1026, %v1030
        %v1033 = vpack.i.b16 %v1024, %v1024
        %v1035 = vlaneseq
        %v1036 = vshrl.u32 %v1035, 7
        %v1037 = vsub.s32 0, %v1036
        %v1038 = vrot.slane %v1033, %v1037
        %v1039 = vadd.bf16 %v1016, %v1031
        %v1040 = vadd.bf16 %v1017, %v1038
        %v1041 = vadd.bf16 %v1018, %v1031
        %v1042 = vadd.bf16 %v1019, %v1038
        %v1043 = vmax.bf16 %v1039, 0
        %v1044 = vmax.bf16 %v1040, 0
        %v1045 = vmax.bf16 %v1041, 0
        %v1046 = vmax.bf16 %v1042, 0
        %s1047 = scalar_lea.vmem [#allocation2], 256
        %v1048 = vld [vmem:[%s1047] sm:$0xff]
        %v1049 = vld [vmem:[%s1047 + $0x8] sm:$0xff]
        %v1050 = vld [vmem:[%s1047 + $0x10] sm:$0xff]
        %v1051 = vld [vmem:[%s1047 + $0x18] sm:$0xff]
        %v1052 = vld [vmem:[%s1047 + $0x20] sm:$0xff]
        %v1053 = vld [vmem:[%s1047 + $0x28] sm:$0xff]
        %v1054 = vld [vmem:[%s1047 + $0x30] sm:$0xff]
        %v1055 = vld [vmem:[%s1047 + $0x38] sm:$0xff]
        %v1056 = vld [vmem:[%s1047 + $0x40] sm:$0xff]
        %v1057 = vld [vmem:[%s1047 + $0x48] sm:$0xff]
        %v1058 = vld [vmem:[%s1047 + $0x50] sm:$0xff]
        %v1059 = vld [vmem:[%s1047 + $0x58] sm:$0xff]
        %v1060 = vld [vmem:[%s1047 + $0x60] sm:$0xff]
        %v1061 = vld [vmem:[%s1047 + $0x68] sm:$0xff]
        %v1062 = vld [vmem:[%s1047 + $0x70] sm:$0xff]
        %v1063 = vld [vmem:[%s1047 + $0x78] sm:$0xff]
        %v1064 = vld [vmem:[%s1047 + $0x80] sm:$0xff]
        %v1065 = vld [vmem:[%s1047 + $0x88] sm:$0xff]
        %v1066 = vld [vmem:[%s1047 + $0x90] sm:$0xff]
        %v1067 = vld [vmem:[%s1047 + $0x98] sm:$0xff]
        %v1068 = vld [vmem:[%s1047 + $0xa0] sm:$0xff]
        %v1069 = vld [vmem:[%s1047 + $0xa8] sm:$0xff]
        %v1070 = vld [vmem:[%s1047 + $0xb0] sm:$0xff]
        %v1071 = vld [vmem:[%s1047 + $0xb8] sm:$0xff]
        %v1072 = vld [vmem:[%s1047 + $0xc0] sm:$0xff]
        %v1073 = vld [vmem:[%s1047 + $0xc8] sm:$0xff]
        %v1074 = vld [vmem:[%s1047 + $0xd0] sm:$0xff]
        %v1075 = vld [vmem:[%s1047 + $0xd8] sm:$0xff]
        %v1076 = vld [vmem:[%s1047 + $0xe0] sm:$0xff]
        %v1077 = vld [vmem:[%s1047 + $0xe8] sm:$0xff]
        %v1078 = vld [vmem:[%s1047 + $0xf0] sm:$0xff]
        %v1079 = vld [vmem:[%s1047 + $0xf8] sm:$0xff]
        %v1112 = vunpack.c.l.b16 %v1048
        %v1113 = vunpack.c.h.b16 %v1048
        %v1114 = vunpack.c.l.b16 %v1049
        %v1115 = vunpack.c.h.b16 %v1049
        %v1116 = vunpack.c.l.b16 %v1050
        %v1117 = vunpack.c.h.b16 %v1050
        %v1118 = vunpack.c.l.b16 %v1051
        %v1119 = vunpack.c.h.b16 %v1051
        %v1120 = vunpack.c.l.b16 %v1052
        %v1121 = vunpack.c.h.b16 %v1052
        %v1122 = vunpack.c.l.b16 %v1053
        %v1123 = vunpack.c.h.b16 %v1053
        %v1124 = vunpack.c.l.b16 %v1054
        %v1125 = vunpack.c.h.b16 %v1054
        %v1126 = vunpack.c.l.b16 %v1055
        %v1127 = vunpack.c.h.b16 %v1055
        %v1128 = vunpack.c.l.b16 %v1056
        %v1129 = vunpack.c.h.b16 %v1056
        %v1130 = vunpack.c.l.b16 %v1057
        %v1131 = vunpack.c.h.b16 %v1057
        %v1132 = vunpack.c.l.b16 %v1058
        %v1133 = vunpack.c.h.b16 %v1058
        %v1134 = vunpack.c.l.b16 %v1059
        %v1135 = vunpack.c.h.b16 %v1059
        %v1136 = vunpack.c.l.b16 %v1060
        %v1137 = vunpack.c.h.b16 %v1060
        %v1138 = vunpack.c.l.b16 %v1061
        %v1139 = vunpack.c.h.b16 %v1061
        %v1140 = vunpack.c.l.b16 %v1062
        %v1141 = vunpack.c.h.b16 %v1062
        %v1142 = vunpack.c.l.b16 %v1063
        %v1143 = vunpack.c.h.b16 %v1063
        %v1144 = vunpack.c.l.b16 %v1064
        %v1145 = vunpack.c.h.b16 %v1064
        %v1146 = vunpack.c.l.b16 %v1065
        %v1147 = vunpack.c.h.b16 %v1065
        %v1148 = vunpack.c.l.b16 %v1066
        %v1149 = vunpack.c.h.b16 %v1066
        %v1150 = vunpack.c.l.b16 %v1067
        %v1151 = vunpack.c.h.b16 %v1067
        %v1152 = vunpack.c.l.b16 %v1068
        %v1153 = vunpack.c.h.b16 %v1068
        %v1154 = vunpack.c.l.b16 %v1069
        %v1155 = vunpack.c.h.b16 %v1069
        %v1156 = vunpack.c.l.b16 %v1070
        %v1157 = vunpack.c.h.b16 %v1070
        %v1158 = vunpack.c.l.b16 %v1071
        %v1159 = vunpack.c.h.b16 %v1071
        %v1160 = vunpack.c.l.b16 %v1072
        %v1161 = vunpack.c.h.b16 %v1072
        %v1162 = vunpack.c.l.b16 %v1073
        %v1163 = vunpack.c.h.b16 %v1073
        %v1164 = vunpack.c.l.b16 %v1074
        %v1165 = vunpack.c.h.b16 %v1074
        %v1166 = vunpack.c.l.b16 %v1075
        %v1167 = vunpack.c.h.b16 %v1075
        %v1168 = vunpack.c.l.b16 %v1076
        %v1169 = vunpack.c.h.b16 %v1076
        %v1170 = vunpack.c.l.b16 %v1077
        %v1171 = vunpack.c.h.b16 %v1077
        %v1172 = vunpack.c.l.b16 %v1078
        %v1173 = vunpack.c.h.b16 %v1078
        %v1174 = vunpack.c.l.b16 %v1079
        %v1175 = vunpack.c.h.b16 %v1079
        %v1176 = vpack.c.b16 %v1114, %v1112
        %v1177 = vpack.c.b16 %v1115, %v1113
        %v1178 = vpack.c.b16 %v1118, %v1116
        %v1179 = vpack.c.b16 %v1119, %v1117
        %v1180 = vpack.c.b16 %v1122, %v1120
        %v1181 = vpack.c.b16 %v1123, %v1121
        %v1182 = vpack.c.b16 %v1126, %v1124
        %v1183 = vpack.c.b16 %v1127, %v1125
        %v1184 = vpack.c.b16 %v1130, %v1128
        %v1185 = vpack.c.b16 %v1131, %v1129
        %v1186 = vpack.c.b16 %v1134, %v1132
        %v1187 = vpack.c.b16 %v1135, %v1133
        %v1188 = vpack.c.b16 %v1138, %v1136
        %v1189 = vpack.c.b16 %v1139, %v1137
        %v1190 = vpack.c.b16 %v1142, %v1140
        %v1191 = vpack.c.b16 %v1143, %v1141
        %v1192 = vpack.c.b16 %v1146, %v1144
        %v1193 = vpack.c.b16 %v1147, %v1145
        %v1194 = vpack.c.b16 %v1150, %v1148
        %v1195 = vpack.c.b16 %v1151, %v1149
        %v1196 = vpack.c.b16 %v1154, %v1152
        %v1197 = vpack.c.b16 %v1155, %v1153
        %v1198 = vpack.c.b16 %v1158, %v1156
        %v1199 = vpack.c.b16 %v1159, %v1157
        %v1200 = vpack.c.b16 %v1162, %v1160
        %v1201 = vpack.c.b16 %v1163, %v1161
        %v1202 = vpack.c.b16 %v1166, %v1164
        %v1203 = vpack.c.b16 %v1167, %v1165
        %v1204 = vpack.c.b16 %v1170, %v1168
        %v1205 = vpack.c.b16 %v1171, %v1169
        %v1206 = vpack.c.b16 %v1174, %v1172
        %v1207 = vpack.c.b16 %v1175, %v1173
        %1240 = vmatprep.subr.bf16.mxu0 %v1177
        %1241 = vmatpush1.bf16.msra.mxu0 %v1176
        %1242 = vmatprep.subr.bf16.mxu0 %v1179
        %1243 = vmatpush1.bf16.msra.mxu0 %v1178
        %1244 = vmatprep.subr.bf16.mxu0 %v1181
        %1245 = vmatpush1.bf16.msra.mxu0 %v1180
        %1246 = vmatprep.subr.bf16.mxu0 %v1183
        %1247 = vmatpush1.bf16.msra.mxu0 %v1182
        %1248 = vmatprep.subr.bf16.mxu0 %v1185
        %1249 = vmatpush1.bf16.msra.mxu0 %v1184
        %1250 = vmatprep.subr.bf16.mxu0 %v1187
        %1251 = vmatpush1.bf16.msra.mxu0 %v1186
        %1252 = vmatprep.subr.bf16.mxu0 %v1189
        %1253 = vmatpush1.bf16.msra.mxu0 %v1188
        %1254 = vmatprep.subr.bf16.mxu0 %v1191
        %1255 = vmatpush1.bf16.msra.mxu0 %v1190
        %1256 = vmatprep.subr.bf16.mxu0 %v1193
        %1257 = vmatpush1.bf16.msra.mxu0 %v1192
        %1258 = vmatprep.subr.bf16.mxu0 %v1195
        %1259 = vmatpush1.bf16.msra.mxu0 %v1194
        %1260 = vmatprep.subr.bf16.mxu0 %v1197
        %1261 = vmatpush1.bf16.msra.mxu0 %v1196
        %1262 = vmatprep.subr.bf16.mxu0 %v1199
        %1263 = vmatpush1.bf16.msra.mxu0 %v1198
        %1264 = vmatprep.subr.bf16.mxu0 %v1201
        %1265 = vmatpush1.bf16.msra.mxu0 %v1200
        %1266 = vmatprep.subr.bf16.mxu0 %v1203
        %1267 = vmatpush1.bf16.msra.mxu0 %v1202
        %1268 = vmatprep.subr.bf16.mxu0 %v1205
        %1269 = vmatpush1.bf16.msra.mxu0 %v1204
        %1270 = vmatprep.subr.bf16.mxu0 %v1207
        %1271 = vmatpush1.bf16.msra.mxu0 %v1206
        %1272 = vmatprep.mubr.bf16.mxu0 %v1044
        %1273 = vmatmul.mubr.bf16.gmra.mrb[0].mxu0 %v1043
        %v1274 = vpop.f32.mrb[0].mxu0
        %v1275 = vadd.f32 0.0, %v1274
        %v1276 = vpop.f32.mrb[0].mxu0
        %v1277 = vadd.f32 0.0, %v1276
        %v1278 = vpop.f32.mrb[0].mxu0
        %v1279 = vadd.f32 0.0, %v1278
        %v1280 = vpop.f32.mrb[0].mxu0
        %v1281 = vadd.f32 0.0, %v1280
        %1282 = vmatprep.mubr.bf16.mxu0 %v1046
        %1283 = vmatmul.mubr.bf16.gmra.mrb[0].mxu0 %v1045
        %v1284 = vpop.f32.mrb[0].mxu0
        %v1285 = vadd.f32 0.0, %v1284
        %v1286 = vpop.f32.mrb[0].mxu0
        %v1287 = vadd.f32 0.0, %v1286
        %v1288 = vpop.f32.mrb[0].mxu0
        %v1289 = vadd.f32 0.0, %v1288
        %v1290 = vpop.f32.mrb[0].mxu0
        %v1291 = vadd.f32 0.0, %v1290
        %1292 = vdwg.mxu0
        %v1293 = vpack.c.bf16 %v1279, %v1275
        %v1294 = vpack.c.bf16 %v1281, %v1277
        %v1295 = vpack.c.bf16 %v1289, %v1285
        %v1296 = vpack.c.bf16 %v1291, %v1287
        %v1297 = vshrl.u32 %v1023, 16
        %v1298 = vpack.i.b16 %v1297, %v1297
        %v1300 = vlaneseq
        %v1301 = vshrl.u32 %v1300, 7
        %v1302 = vsub.s32 0, %v1301
        %v1303 = vrot.slane %v1298, %v1302
        %v1304 = vshrl.u32 %v1024, 16
        %v1305 = vpack.i.b16 %v1304, %v1304
        %v1307 = vlaneseq
        %v1308 = vshrl.u32 %v1307, 7
        %v1309 = vsub.s32 0, %v1308
        %v1310 = vrot.slane %v1305, %v1309
        %v1311 = vadd.bf16 %v1293, %v1303
        %v1312 = vadd.bf16 %v1294, %v1310
        %v1313 = vadd.bf16 %v1295, %v1303
        %v1314 = vadd.bf16 %v1296, %v1310
        %v1315 = vmax.bf16 %v1311, 0
        %v1316 = vmax.bf16 %v1312, 0
        %v1317 = vmax.bf16 %v1313, 0
        %v1318 = vmax.bf16 %v1314, 0
        %v1319 = vld [vmem:[%s3] sm:$0xf]
        %v1320 = vld [vmem:[%s3 + $0x4] sm:$0xf]
        %v1321 = vld [vmem:[%s3 + $0x8] sm:$0xf]
        %v1322 = vld [vmem:[%s3 + $0xc] sm:$0xf]
        %v1323 = vld [vmem:[%s3 + $0x10] sm:$0xf]
        %v1324 = vld [vmem:[%s3 + $0x14] sm:$0xf]
        %v1325 = vld [vmem:[%s3 + $0x18] sm:$0xf]
        %v1326 = vld [vmem:[%s3 + $0x1c] sm:$0xf]
        %v1327 = vld [vmem:[%s3 + $0x20] sm:$0xf]
        %v1328 = vld [vmem:[%s3 + $0x24] sm:$0xf]
        %v1329 = vld [vmem:[%s3 + $0x28] sm:$0xf]
        %v1330 = vld [vmem:[%s3 + $0x2c] sm:$0xf]
        %v1331 = vld [vmem:[%s3 + $0x30] sm:$0xf]
        %v1332 = vld [vmem:[%s3 + $0x34] sm:$0xf]
        %v1333 = vld [vmem:[%s3 + $0x38] sm:$0xf]
        %v1334 = vld [vmem:[%s3 + $0x3c] sm:$0xf]
        %v1335 = vld [vmem:[%s3 + $0x40] sm:$0xf]
        %v1336 = vld [vmem:[%s3 + $0x44] sm:$0xf]
        %v1337 = vld [vmem:[%s3 + $0x48] sm:$0xf]
        %v1338 = vld [vmem:[%s3 + $0x4c] sm:$0xf]
        %v1339 = vld [vmem:[%s3 + $0x50] sm:$0xf]
        %v1340 = vld [vmem:[%s3 + $0x54] sm:$0xf]
        %v1341 = vld [vmem:[%s3 + $0x58] sm:$0xf]
        %v1342 = vld [vmem:[%s3 + $0x5c] sm:$0xf]
        %v1343 = vld [vmem:[%s3 + $0x60] sm:$0xf]
        %v1344 = vld [vmem:[%s3 + $0x64] sm:$0xf]
        %v1345 = vld [vmem:[%s3 + $0x68] sm:$0xf]
        %v1346 = vld [vmem:[%s3 + $0x6c] sm:$0xf]
        %v1347 = vld [vmem:[%s3 + $0x70] sm:$0xf]
        %v1348 = vld [vmem:[%s3 + $0x74] sm:$0xf]
        %v1349 = vld [vmem:[%s3 + $0x78] sm:$0xf]
        %v1350 = vld [vmem:[%s3 + $0x7c] sm:$0xf]
        %v1383 = vunpack.c.l.b16 %v1319
        %v1384 = vunpack.c.l.b16 %v1320
        %v1385 = vunpack.c.l.b16 %v1321
        %v1386 = vunpack.c.l.b16 %v1322
        %v1387 = vunpack.c.l.b16 %v1323
        %v1388 = vunpack.c.l.b16 %v1324
        %v1389 = vunpack.c.l.b16 %v1325
        %v1390 = vunpack.c.l.b16 %v1326
        %v1391 = vunpack.c.l.b16 %v1327
        %v1392 = vunpack.c.l.b16 %v1328
        %v1393 = vunpack.c.l.b16 %v1329
        %v1394 = vunpack.c.l.b16 %v1330
        %v1395 = vunpack.c.l.b16 %v1331
        %v1396 = vunpack.c.l.b16 %v1332
        %v1397 = vunpack.c.l.b16 %v1333
        %v1398 = vunpack.c.l.b16 %v1334
        %v1399 = vunpack.c.l.b16 %v1335
        %v1400 = vunpack.c.l.b16 %v1336
        %v1401 = vunpack.c.l.b16 %v1337
        %v1402 = vunpack.c.l.b16 %v1338
        %v1403 = vunpack.c.l.b16 %v1339
        %v1404 = vunpack.c.l.b16 %v1340
        %v1405 = vunpack.c.l.b16 %v1341
        %v1406 = vunpack.c.l.b16 %v1342
        %v1407 = vunpack.c.l.b16 %v1343
        %v1408 = vunpack.c.l.b16 %v1344
        %v1409 = vunpack.c.l.b16 %v1345
        %v1410 = vunpack.c.l.b16 %v1346
        %v1411 = vunpack.c.l.b16 %v1347
        %v1412 = vunpack.c.l.b16 %v1348
        %v1413 = vunpack.c.l.b16 %v1349
        %v1414 = vunpack.c.l.b16 %v1350
        %v1415 = vpack.c.b16 %v1384, %v1383
        %v1416 = vpack.c.b16 %v1386, %v1385
        %v1417 = vpack.c.b16 %v1388, %v1387
        %v1418 = vpack.c.b16 %v1390, %v1389
        %v1419 = vpack.c.b16 %v1392, %v1391
        %v1420 = vpack.c.b16 %v1394, %v1393
        %v1421 = vpack.c.b16 %v1396, %v1395
        %v1422 = vpack.c.b16 %v1398, %v1397
        %v1423 = vpack.c.b16 %v1400, %v1399
        %v1424 = vpack.c.b16 %v1402, %v1401
        %v1425 = vpack.c.b16 %v1404, %v1403
        %v1426 = vpack.c.b16 %v1406, %v1405
        %v1427 = vpack.c.b16 %v1408, %v1407
        %v1428 = vpack.c.b16 %v1410, %v1409
        %v1429 = vpack.c.b16 %v1412, %v1411
        %v1430 = vpack.c.b16 %v1414, %v1413
        %1447 = vmatprep.subr.bf16.mxu0 0
        %1448 = vmatpush1.bf16.msra.mxu0 %v1415
        %1449 = vmatprep.subr.bf16.mxu0 0
        %1450 = vmatpush1.bf16.msra.mxu0 %v1416
        %1451 = vmatprep.subr.bf16.mxu0 0
        %1452 = vmatpush1.bf16.msra.mxu0 %v1417
        %1453 = vmatprep.subr.bf16.mxu0 0
        %1454 = vmatpush1.bf16.msra.mxu0 %v1418
        %1455 = vmatprep.subr.bf16.mxu0 0
        %1456 = vmatpush1.bf16.msra.mxu0 %v1419
        %1457 = vmatprep.subr.bf16.mxu0 0
        %1458 = vmatpush1.bf16.msra.mxu0 %v1420
        %1459 = vmatprep.subr.bf16.mxu0 0
        %1460 = vmatpush1.bf16.msra.mxu0 %v1421
        %1461 = vmatprep.subr.bf16.mxu0 0
        %1462 = vmatpush1.bf16.msra.mxu0 %v1422
        %1463 = vmatprep.subr.bf16.mxu0 0
        %1464 = vmatpush1.bf16.msra.mxu0 %v1423
        %1465 = vmatprep.subr.bf16.mxu0 0
        %1466 = vmatpush1.bf16.msra.mxu0 %v1424
        %1467 = vmatprep.subr.bf16.mxu0 0
        %1468 = vmatpush1.bf16.msra.mxu0 %v1425
        %1469 = vmatprep.subr.bf16.mxu0 0
        %1470 = vmatpush1.bf16.msra.mxu0 %v1426
        %1471 = vmatprep.subr.bf16.mxu0 0
        %1472 = vmatpush1.bf16.msra.mxu0 %v1427
        %1473 = vmatprep.subr.bf16.mxu0 0
        %1474 = vmatpush1.bf16.msra.mxu0 %v1428
        %1475 = vmatprep.subr.bf16.mxu0 0
        %1476 = vmatpush1.bf16.msra.mxu0 %v1429
        %1477 = vmatprep.subr.bf16.mxu0 0
        %1478 = vmatpush1.bf16.msra.mxu0 %v1430
        %1479 = vmatprep.mubr.bf16.mxu0 %v1316
        %1480 = vmatmul.mubr.bf16.gmra.mrb[0].mxu0 %v1315
        %v1481 = vpop.f32.mrb[0].mxu0
        %v1482 = vadd.f32 0.0, %v1481
        %v1483 = vpop.f32.mrb[0].mxu0
        %v1484 = vpop.f32.mrb[0].mxu0
        %v1485 = vadd.f32 0.0, %v1484
        %v1486 = vpop.f32.mrb[0].mxu0
        %1487 = vmatprep.mubr.bf16.mxu0 %v1318
        %1488 = vmatmul.mubr.bf16.gmra.mrb[0].mxu0 %v1317
        %v1489 = vpop.f32.mrb[0].mxu0
        %v1490 = vadd.f32 0.0, %v1489
        %v1491 = vpop.f32.mrb[0].mxu0
        %v1492 = vpop.f32.mrb[0].mxu0
        %v1493 = vadd.f32 0.0, %v1492
        %v1494 = vpop.f32.mrb[0].mxu0
        %1495 = vdwg.mxu0
        %v1496 = vpack.c.bf16 %v1485, %v1482
        %v1497 = vpack.c.bf16 %v1493, %v1490
        %v1499 = vpack.i.b16 %v382, %v382
        %v1501 = vlaneseq
        %v1502 = vshrl.u32 %v1501, 7
        %v1503 = vsub.s32 0, %v1502
        %v1504 = vrot.slane %v1499, %v1503
        %v1505 = vadd.bf16 %v1496, %v1504
        %v1506 = vadd.bf16 %v1497, %v1504
        %v1507 = vmax.bf16 %v1505, 0
        %v1508 = vmax.bf16 %v1506, 0
        %s1509 = scalar_lea.vmem [#allocation2], 512
        %v1510 = vld [vmem:[%s1509] sm:$0xff]
        %v1511 = vld [vmem:[%s1509 + $0x8] sm:$0xff]
        %v1512 = vld [vmem:[%s1509 + $0x10] sm:$0xff]
        %v1513 = vld [vmem:[%s1509 + $0x18] sm:$0xff]
        %v1514 = vld [vmem:[%s1509 + $0x20] sm:$0xff]
        %v1515 = vld [vmem:[%s1509 + $0x28] sm:$0xff]
        %v1516 = vld [vmem:[%s1509 + $0x30] sm:$0xff]
        %v1517 = vld [vmem:[%s1509 + $0x38] sm:$0xff]
        %v1518 = vld [vmem:[%s1509 + $0x40] sm:$0xff]
        %v1519 = vld [vmem:[%s1509 + $0x48] sm:$0xff]
        %v1520 = vld [vmem:[%s1509 + $0x50] sm:$0xff]
        %v1521 = vld [vmem:[%s1509 + $0x58] sm:$0xff]
        %v1522 = vld [vmem:[%s1509 + $0x60] sm:$0xff]
        %v1523 = vld [vmem:[%s1509 + $0x68] sm:$0xff]
        %v1524 = vld [vmem:[%s1509 + $0x70] sm:$0xff]
        %v1525 = vld [vmem:[%s1509 + $0x78] sm:$0xff]
        %v1526 = vld [vmem:[%s1509 + $0x80] sm:$0xff]
        %v1527 = vld [vmem:[%s1509 + $0x88] sm:$0xff]
        %v1528 = vld [vmem:[%s1509 + $0x90] sm:$0xff]
        %v1529 = vld [vmem:[%s1509 + $0x98] sm:$0xff]
        %v1530 = vld [vmem:[%s1509 + $0xa0] sm:$0xff]
        %v1531 = vld [vmem:[%s1509 + $0xa8] sm:$0xff]
        %v1532 = vld [vmem:[%s1509 + $0xb0] sm:$0xff]
        %v1533 = vld [vmem:[%s1509 + $0xb8] sm:$0xff]
        %v1534 = vld [vmem:[%s1509 + $0xc0] sm:$0xff]
        %v1535 = vld [vmem:[%s1509 + $0xc8] sm:$0xff]
        %v1536 = vld [vmem:[%s1509 + $0xd0] sm:$0xff]
        %v1537 = vld [vmem:[%s1509 + $0xd8] sm:$0xff]
        %v1538 = vld [vmem:[%s1509 + $0xe0] sm:$0xff]
        %v1539 = vld [vmem:[%s1509 + $0xe8] sm:$0xff]
        %v1540 = vld [vmem:[%s1509 + $0xf0] sm:$0xff]
        %v1541 = vld [vmem:[%s1509 + $0xf8] sm:$0xff]
        %v1574 = vunpack.c.l.b16 %v1510
        %v1575 = vunpack.c.h.b16 %v1510
        %v1576 = vunpack.c.l.b16 %v1511
        %v1577 = vunpack.c.h.b16 %v1511
        %v1578 = vunpack.c.l.b16 %v1512
        %v1579 = vunpack.c.h.b16 %v1512
        %v1580 = vunpack.c.l.b16 %v1513
        %v1581 = vunpack.c.h.b16 %v1513
        %v1582 = vunpack.c.l.b16 %v1514
        %v1583 = vunpack.c.h.b16 %v1514
        %v1584 = vunpack.c.l.b16 %v1515
        %v1585 = vunpack.c.h.b16 %v1515
        %v1586 = vunpack.c.l.b16 %v1516
        %v1587 = vunpack.c.h.b16 %v1516
        %v1588 = vunpack.c.l.b16 %v1517
        %v1589 = vunpack.c.h.b16 %v1517
        %v1590 = vunpack.c.l.b16 %v1518
        %v1591 = vunpack.c.h.b16 %v1518
        %v1592 = vunpack.c.l.b16 %v1519
        %v1593 = vunpack.c.h.b16 %v1519
        %v1594 = vunpack.c.l.b16 %v1520
        %v1595 = vunpack.c.h.b16 %v1520
        %v1596 = vunpack.c.l.b16 %v1521
        %v1597 = vunpack.c.h.b16 %v1521
        %v1598 = vunpack.c.l.b16 %v1522
        %v1599 = vunpack.c.h.b16 %v1522
        %v1600 = vunpack.c.l.b16 %v1523
        %v1601 = vunpack.c.h.b16 %v1523
        %v1602 = vunpack.c.l.b16 %v1524
        %v1603 = vunpack.c.h.b16 %v1524
        %v1604 = vunpack.c.l.b16 %v1525
        %v1605 = vunpack.c.h.b16 %v1525
        %v1606 = vunpack.c.l.b16 %v1526
        %v1607 = vunpack.c.h.b16 %v1526
        %v1608 = vunpack.c.l.b16 %v1527
        %v1609 = vunpack.c.h.b16 %v1527
        %v1610 = vunpack.c.l.b16 %v1528
        %v1611 = vunpack.c.h.b16 %v1528
        %v1612 = vunpack.c.l.b16 %v1529
        %v1613 = vunpack.c.h.b16 %v1529
        %v1614 = vunpack.c.l.b16 %v1530
        %v1615 = vunpack.c.h.b16 %v1530
        %v1616 = vunpack.c.l.b16 %v1531
        %v1617 = vunpack.c.h.b16 %v1531
        %v1618 = vunpack.c.l.b16 %v1532
        %v1619 = vunpack.c.h.b16 %v1532
        %v1620 = vunpack.c.l.b16 %v1533
        %v1621 = vunpack.c.h.b16 %v1533
        %v1622 = vunpack.c.l.b16 %v1534
        %v1623 = vunpack.c.h.b16 %v1534
        %v1624 = vunpack.c.l.b16 %v1535
        %v1625 = vunpack.c.h.b16 %v1535
        %v1626 = vunpack.c.l.b16 %v1536
        %v1627 = vunpack.c.h.b16 %v1536
        %v1628 = vunpack.c.l.b16 %v1537
        %v1629 = vunpack.c.h.b16 %v1537
        %v1630 = vunpack.c.l.b16 %v1538
        %v1631 = vunpack.c.h.b16 %v1538
        %v1632 = vunpack.c.l.b16 %v1539
        %v1633 = vunpack.c.h.b16 %v1539
        %v1634 = vunpack.c.l.b16 %v1540
        %v1635 = vunpack.c.h.b16 %v1540
        %v1636 = vunpack.c.l.b16 %v1541
        %v1637 = vunpack.c.h.b16 %v1541
        %v1638 = vpack.c.b16 %v1576, %v1574
        %v1639 = vpack.c.b16 %v1577, %v1575
        %v1640 = vpack.c.b16 %v1580, %v1578
        %v1641 = vpack.c.b16 %v1581, %v1579
        %v1642 = vpack.c.b16 %v1584, %v1582
        %v1643 = vpack.c.b16 %v1585, %v1583
        %v1644 = vpack.c.b16 %v1588, %v1586
        %v1645 = vpack.c.b16 %v1589, %v1587
        %v1646 = vpack.c.b16 %v1592, %v1590
        %v1647 = vpack.c.b16 %v1593, %v1591
        %v1648 = vpack.c.b16 %v1596, %v1594
        %v1649 = vpack.c.b16 %v1597, %v1595
        %v1650 = vpack.c.b16 %v1600, %v1598
        %v1651 = vpack.c.b16 %v1601, %v1599
        %v1652 = vpack.c.b16 %v1604, %v1602
        %v1653 = vpack.c.b16 %v1605, %v1603
        %v1654 = vpack.c.b16 %v1608, %v1606
        %v1655 = vpack.c.b16 %v1609, %v1607
        %v1656 = vpack.c.b16 %v1612, %v1610
        %v1657 = vpack.c.b16 %v1613, %v1611
        %v1658 = vpack.c.b16 %v1616, %v1614
        %v1659 = vpack.c.b16 %v1617, %v1615
        %v1660 = vpack.c.b16 %v1620, %v1618
        %v1661 = vpack.c.b16 %v1621, %v1619
        %v1662 = vpack.c.b16 %v1624, %v1622
        %v1663 = vpack.c.b16 %v1625, %v1623
        %v1664 = vpack.c.b16 %v1628, %v1626
        %v1665 = vpack.c.b16 %v1629, %v1627
        %v1666 = vpack.c.b16 %v1632, %v1630
        %v1667 = vpack.c.b16 %v1633, %v1631
        %v1668 = vpack.c.b16 %v1636, %v1634
        %v1669 = vpack.c.b16 %v1637, %v1635
        %1702 = vmatprep.subr.bf16.mxu0 %v1639
        %1703 = vmatpush1.bf16.msra.mxu0 %v1638
        %1704 = vmatprep.subr.bf16.mxu0 %v1641
        %1705 = vmatpush1.bf16.msra.mxu0 %v1640
        %1706 = vmatprep.subr.bf16.mxu0 %v1643
        %1707 = vmatpush1.bf16.msra.mxu0 %v1642
        %1708 = vmatprep.subr.bf16.mxu0 %v1645
        %1709 = vmatpush1.bf16.msra.mxu0 %v1644
        %1710 = vmatprep.subr.bf16.mxu0 %v1647
        %1711 = vmatpush1.bf16.msra.mxu0 %v1646
        %1712 = vmatprep.subr.bf16.mxu0 %v1649
        %1713 = vmatpush1.bf16.msra.mxu0 %v1648
        %1714 = vmatprep.subr.bf16.mxu0 %v1651
        %1715 = vmatpush1.bf16.msra.mxu0 %v1650
        %1716 = vmatprep.subr.bf16.mxu0 %v1653
        %1717 = vmatpush1.bf16.msra.mxu0 %v1652
        %1718 = vmatprep.subr.bf16.mxu0 %v1655
        %1719 = vmatpush1.bf16.msra.mxu0 %v1654
        %1720 = vmatprep.subr.bf16.mxu0 %v1657
        %1721 = vmatpush1.bf16.msra.mxu0 %v1656
        %1722 = vmatprep.subr.bf16.mxu0 %v1659
        %1723 = vmatpush1.bf16.msra.mxu0 %v1658
        %1724 = vmatprep.subr.bf16.mxu0 %v1661
        %1725 = vmatpush1.bf16.msra.mxu0 %v1660
        %1726 = vmatprep.subr.bf16.mxu0 %v1663
        %1727 = vmatpush1.bf16.msra.mxu0 %v1662
        %1728 = vmatprep.subr.bf16.mxu0 %v1665
        %1729 = vmatpush1.bf16.msra.mxu0 %v1664
        %1730 = vmatprep.subr.bf16.mxu0 %v1667
        %1731 = vmatpush1.bf16.msra.mxu0 %v1666
        %1732 = vmatprep.subr.bf16.mxu0 %v1669
        %1733 = vmatpush1.bf16.msra.mxu0 %v1668
        %1734 = vmatprep.mubr.bf16.mxu0 %v766
        %1735 = vmatmul.mubr.bf16.gmra.mrb[0].mxu0 %v765
        %v1736 = vpop.f32.mrb[0].mxu0
        %v1737 = vadd.f32 0.0, %v1736
        %v1738 = vpop.f32.mrb[0].mxu0
        %v1739 = vadd.f32 0.0, %v1738
        %v1740 = vpop.f32.mrb[0].mxu0
        %v1741 = vadd.f32 0.0, %v1740
        %v1742 = vpop.f32.mrb[0].mxu0
        %v1743 = vadd.f32 0.0, %v1742
        %1744 = vmatprep.mubr.bf16.mxu0 %v770
        %1745 = vmatmul.mubr.bf16.gmra.mrb[0].mxu0 %v769
        %v1746 = vpop.f32.mrb[0].mxu0
        %v1747 = vadd.f32 0.0, %v1746
        %v1748 = vpop.f32.mrb[0].mxu0
        %v1749 = vadd.f32 0.0, %v1748
        %v1750 = vpop.f32.mrb[0].mxu0
        %v1751 = vadd.f32 0.0, %v1750
        %v1752 = vpop.f32.mrb[0].mxu0
        %v1753 = vadd.f32 0.0, %v1752
        %1754 = vdwg.mxu0
        %v1755 = vpack.c.bf16 %v1741, %v1737
        %v1756 = vpack.c.bf16 %v1743, %v1739
        %v1757 = vpack.c.bf16 %v1751, %v1747
        %v1758 = vpack.c.bf16 %v1753, %v1749
        %v1759 = vlaneseq
        %v1760 = vshrl.u32 %v1759, 7
        %v1761 = vsub.s32 1, %v1760
        %v1762 = vrot.slane %v1026, %v1761
        %v1763 = vlaneseq
        %v1764 = vshrl.u32 %v1763, 7
        %v1765 = vsub.s32 1, %v1764
        %v1766 = vrot.slane %v1033, %v1765
        %v1767 = vadd.bf16 %v1755, %v1762
        %v1768 = vadd.bf16 %v1756, %v1766
        %v1769 = vadd.bf16 %v1757, %v1762
        %v1770 = vadd.bf16 %v1758, %v1766
        %v1771 = vmax.bf16 %v1767, 0
        %v1772 = vmax.bf16 %v1768, 0
        %v1773 = vmax.bf16 %v1769, 0
        %v1774 = vmax.bf16 %v1770, 0
        %s1775 = scalar_lea.vmem [#allocation2], 768
        %v1776 = vld [vmem:[%s1775] sm:$0xff]
        %v1777 = vld [vmem:[%s1775 + $0x8] sm:$0xff]
        %v1778 = vld [vmem:[%s1775 + $0x10] sm:$0xff]
        %v1779 = vld [vmem:[%s1775 + $0x18] sm:$0xff]
        %v1780 = vld [vmem:[%s1775 + $0x20] sm:$0xff]
        %v1781 = vld [vmem:[%s1775 + $0x28] sm:$0xff]
        %v1782 = vld [vmem:[%s1775 + $0x30] sm:$0xff]
        %v1783 = vld [vmem:[%s1775 + $0x38] sm:$0xff]
        %v1784 = vld [vmem:[%s1775 + $0x40] sm:$0xff]
        %v1785 = vld [vmem:[%s1775 + $0x48] sm:$0xff]
        %v1786 = vld [vmem:[%s1775 + $0x50] sm:$0xff]
        %v1787 = vld [vmem:[%s1775 + $0x58] sm:$0xff]
        %v1788 = vld [vmem:[%s1775 + $0x60] sm:$0xff]
        %v1789 = vld [vmem:[%s1775 + $0x68] sm:$0xff]
        %v1790 = vld [vmem:[%s1775 + $0x70] sm:$0xff]
        %v1791 = vld [vmem:[%s1775 + $0x78] sm:$0xff]
        %v1792 = vld [vmem:[%s1775 + $0x80] sm:$0xff]
        %v1793 = vld [vmem:[%s1775 + $0x88] sm:$0xff]
        %v1794 = vld [vmem:[%s1775 + $0x90] sm:$0xff]
        %v1795 = vld [vmem:[%s1775 + $0x98] sm:$0xff]
        %v1796 = vld [vmem:[%s1775 + $0xa0] sm:$0xff]
        %v1797 = vld [vmem:[%s1775 + $0xa8] sm:$0xff]
        %v1798 = vld [vmem:[%s1775 + $0xb0] sm:$0xff]
        %v1799 = vld [vmem:[%s1775 + $0xb8] sm:$0xff]
        %v1800 = vld [vmem:[%s1775 + $0xc0] sm:$0xff]
        %v1801 = vld [vmem:[%s1775 + $0xc8] sm:$0xff]
        %v1802 = vld [vmem:[%s1775 + $0xd0] sm:$0xff]
        %v1803 = vld [vmem:[%s1775 + $0xd8] sm:$0xff]
        %v1804 = vld [vmem:[%s1775 + $0xe0] sm:$0xff]
        %v1805 = vld [vmem:[%s1775 + $0xe8] sm:$0xff]
        %v1806 = vld [vmem:[%s1775 + $0xf0] sm:$0xff]
        %v1807 = vld [vmem:[%s1775 + $0xf8] sm:$0xff]
        %v1840 = vunpack.c.l.b16 %v1776
        %v1841 = vunpack.c.h.b16 %v1776
        %v1842 = vunpack.c.l.b16 %v1777
        %v1843 = vunpack.c.h.b16 %v1777
        %v1844 = vunpack.c.l.b16 %v1778
        %v1845 = vunpack.c.h.b16 %v1778
        %v1846 = vunpack.c.l.b16 %v1779
        %v1847 = vunpack.c.h.b16 %v1779
        %v1848 = vunpack.c.l.b16 %v1780
        %v1849 = vunpack.c.h.b16 %v1780
        %v1850 = vunpack.c.l.b16 %v1781
        %v1851 = vunpack.c.h.b16 %v1781
        %v1852 = vunpack.c.l.b16 %v1782
        %v1853 = vunpack.c.h.b16 %v1782
        %v1854 = vunpack.c.l.b16 %v1783
        %v1855 = vunpack.c.h.b16 %v1783
        %v1856 = vunpack.c.l.b16 %v1784
        %v1857 = vunpack.c.h.b16 %v1784
        %v1858 = vunpack.c.l.b16 %v1785
        %v1859 = vunpack.c.h.b16 %v1785
        %v1860 = vunpack.c.l.b16 %v1786
        %v1861 = vunpack.c.h.b16 %v1786
        %v1862 = vunpack.c.l.b16 %v1787
        %v1863 = vunpack.c.h.b16 %v1787
        %v1864 = vunpack.c.l.b16 %v1788
        %v1865 = vunpack.c.h.b16 %v1788
        %v1866 = vunpack.c.l.b16 %v1789
        %v1867 = vunpack.c.h.b16 %v1789
        %v1868 = vunpack.c.l.b16 %v1790
        %v1869 = vunpack.c.h.b16 %v1790
        %v1870 = vunpack.c.l.b16 %v1791
        %v1871 = vunpack.c.h.b16 %v1791
        %v1872 = vunpack.c.l.b16 %v1792
        %v1873 = vunpack.c.h.b16 %v1792
        %v1874 = vunpack.c.l.b16 %v1793
        %v1875 = vunpack.c.h.b16 %v1793
        %v1876 = vunpack.c.l.b16 %v1794
        %v1877 = vunpack.c.h.b16 %v1794
        %v1878 = vunpack.c.l.b16 %v1795
        %v1879 = vunpack.c.h.b16 %v1795
        %v1880 = vunpack.c.l.b16 %v1796
        %v1881 = vunpack.c.h.b16 %v1796
        %v1882 = vunpack.c.l.b16 %v1797
        %v1883 = vunpack.c.h.b16 %v1797
        %v1884 = vunpack.c.l.b16 %v1798
        %v1885 = vunpack.c.h.b16 %v1798
        %v1886 = vunpack.c.l.b16 %v1799
        %v1887 = vunpack.c.h.b16 %v1799
        %v1888 = vunpack.c.l.b16 %v1800
        %v1889 = vunpack.c.h.b16 %v1800
        %v1890 = vunpack.c.l.b16 %v1801
        %v1891 = vunpack.c.h.b16 %v1801
        %v1892 = vunpack.c.l.b16 %v1802
        %v1893 = vunpack.c.h.b16 %v1802
        %v1894 = vunpack.c.l.b16 %v1803
        %v1895 = vunpack.c.h.b16 %v1803
        %v1896 = vunpack.c.l.b16 %v1804
        %v1897 = vunpack.c.h.b16 %v1804
        %v1898 = vunpack.c.l.b16 %v1805
        %v1899 = vunpack.c.h.b16 %v1805
        %v1900 = vunpack.c.l.b16 %v1806
        %v1901 = vunpack.c.h.b16 %v1806
        %v1902 = vunpack.c.l.b16 %v1807
        %v1903 = vunpack.c.h.b16 %v1807
        %v1904 = vpack.c.b16 %v1842, %v1840
        %v1905 = vpack.c.b16 %v1843, %v1841
        %v1906 = vpack.c.b16 %v1846, %v1844
        %v1907 = vpack.c.b16 %v1847, %v1845
        %v1908 = vpack.c.b16 %v1850, %v1848
        %v1909 = vpack.c.b16 %v1851, %v1849
        %v1910 = vpack.c.b16 %v1854, %v1852
        %v1911 = vpack.c.b16 %v1855, %v1853
        %v1912 = vpack.c.b16 %v1858, %v1856
        %v1913 = vpack.c.b16 %v1859, %v1857
        %v1914 = vpack.c.b16 %v1862, %v1860
        %v1915 = vpack.c.b16 %v1863, %v1861
        %v1916 = vpack.c.b16 %v1866, %v1864
        %v1917 = vpack.c.b16 %v1867, %v1865
        %v1918 = vpack.c.b16 %v1870, %v1868
        %v1919 = vpack.c.b16 %v1871, %v1869
        %v1920 = vpack.c.b16 %v1874, %v1872
        %v1921 = vpack.c.b16 %v1875, %v1873
        %v1922 = vpack.c.b16 %v1878, %v1876
        %v1923 = vpack.c.b16 %v1879, %v1877
        %v1924 = vpack.c.b16 %v1882, %v1880
        %v1925 = vpack.c.b16 %v1883, %v1881
        %v1926 = vpack.c.b16 %v1886, %v1884
        %v1927 = vpack.c.b16 %v1887, %v1885
        %v1928 = vpack.c.b16 %v1890, %v1888
        %v1929 = vpack.c.b16 %v1891, %v1889
        %v1930 = vpack.c.b16 %v1894, %v1892
        %v1931 = vpack.c.b16 %v1895, %v1893
        %v1932 = vpack.c.b16 %v1898, %v1896
        %v1933 = vpack.c.b16 %v1899, %v1897
        %v1934 = vpack.c.b16 %v1902, %v1900
        %v1935 = vpack.c.b16 %v1903, %v1901
        %1968 = vmatprep.subr.bf16.mxu0 %v1905
        %1969 = vmatpush1.bf16.msra.mxu0 %v1904
        %1970 = vmatprep.subr.bf16.mxu0 %v1907
        %1971 = vmatpush1.bf16.msra.mxu0 %v1906
        %1972 = vmatprep.subr.bf16.mxu0 %v1909
        %1973 = vmatpush1.bf16.msra.mxu0 %v1908
        %1974 = vmatprep.subr.bf16.mxu0 %v1911
        %1975 = vmatpush1.bf16.msra.mxu0 %v1910
        %1976 = vmatprep.subr.bf16.mxu0 %v1913
        %1977 = vmatpush1.bf16.msra.mxu0 %v1912
        %1978 = vmatprep.subr.bf16.mxu0 %v1915
        %1979 = vmatpush1.bf16.msra.mxu0 %v1914
        %1980 = vmatprep.subr.bf16.mxu0 %v1917
        %1981 = vmatpush1.bf16.msra.mxu0 %v1916
        %1982 = vmatprep.subr.bf16.mxu0 %v1919
        %1983 = vmatpush1.bf16.msra.mxu0 %v1918
        %1984 = vmatprep.subr.bf16.mxu0 %v1921
        %1985 = vmatpush1.bf16.msra.mxu0 %v1920
        %1986 = vmatprep.subr.bf16.mxu0 %v1923
        %1987 = vmatpush1.bf16.msra.mxu0 %v1922
        %1988 = vmatprep.subr.bf16.mxu0 %v1925
        %1989 = vmatpush1.bf16.msra.mxu0 %v1924
        %1990 = vmatprep.subr.bf16.mxu0 %v1927
        %1991 = vmatpush1.bf16.msra.mxu0 %v1926
        %1992 = vmatprep.subr.bf16.mxu0 %v1929
        %1993 = vmatpush1.bf16.msra.mxu0 %v1928
        %1994 = vmatprep.subr.bf16.mxu0 %v1931
        %1995 = vmatpush1.bf16.msra.mxu0 %v1930
        %1996 = vmatprep.subr.bf16.mxu0 %v1933
        %1997 = vmatpush1.bf16.msra.mxu0 %v1932
        %1998 = vmatprep.subr.bf16.mxu0 %v1935
        %1999 = vmatpush1.bf16.msra.mxu0 %v1934
        %2000 = vmatprep.mubr.bf16.mxu0 %v1772
        %2001 = vmatmul.mubr.bf16.gmra.mrb[0].mxu0 %v1771
        %v2002 = vpop.f32.mrb[0].mxu0
        %v2003 = vadd.f32 0.0, %v2002
        %v2004 = vpop.f32.mrb[0].mxu0
        %v2005 = vadd.f32 0.0, %v2004
        %v2006 = vpop.f32.mrb[0].mxu0
        %v2007 = vadd.f32 0.0, %v2006
        %v2008 = vpop.f32.mrb[0].mxu0
        %v2009 = vadd.f32 0.0, %v2008
        %2010 = vmatprep.mubr.bf16.mxu0 %v1774
        %2011 = vmatmul.mubr.bf16.gmra.mrb[0].mxu0 %v1773
        %v2012 = vpop.f32.mrb[0].mxu0
        %v2013 = vadd.f32 0.0, %v2012
        %v2014 = vpop.f32.mrb[0].mxu0
        %v2015 = vadd.f32 0.0, %v2014
        %v2016 = vpop.f32.mrb[0].mxu0
        %v2017 = vadd.f32 0.0, %v2016
        %v2018 = vpop.f32.mrb[0].mxu0
        %v2019 = vadd.f32 0.0, %v2018
        %2020 = vdwg.mxu0
        %v2021 = vpack.c.bf16 %v2007, %v2003
        %v2022 = vpack.c.bf16 %v2009, %v2005
        %v2023 = vpack.c.bf16 %v2017, %v2013
        %v2024 = vpack.c.bf16 %v2019, %v2015
        %v2025 = vlaneseq
        %v2026 = vshrl.u32 %v2025, 7
        %v2027 = vsub.s32 1, %v2026
        %v2028 = vrot.slane %v1298, %v2027
        %v2029 = vlaneseq
        %v2030 = vshrl.u32 %v2029, 7
        %v2031 = vsub.s32 1, %v2030
        %v2032 = vrot.slane %v1305, %v2031
        %v2033 = vadd.bf16 %v2021, %v2028
        %v2034 = vadd.bf16 %v2022, %v2032
        %v2035 = vadd.bf16 %v2023, %v2028
        %v2036 = vadd.bf16 %v2024, %v2032
        %v2037 = vmax.bf16 %v2033, 0
        %v2038 = vmax.bf16 %v2034, 0
        %v2039 = vmax.bf16 %v2035, 0
        %v2040 = vmax.bf16 %v2036, 0
        %s2041 = scalar_lea.vmem %s3, 128
        %v2042 = vld [vmem:[%s2041] sm:$0xf]
        %v2043 = vld [vmem:[%s2041 + $0x4] sm:$0xf]
        %v2044 = vld [vmem:[%s2041 + $0x8] sm:$0xf]
        %v2045 = vld [vmem:[%s2041 + $0xc] sm:$0xf]
        %v2046 = vld [vmem:[%s2041 + $0x10] sm:$0xf]
        %v2047 = vld [vmem:[%s2041 + $0x14] sm:$0xf]
        %v2048 = vld [vmem:[%s2041 + $0x18] sm:$0xf]
        %v2049 = vld [vmem:[%s2041 + $0x1c] sm:$0xf]
        %v2050 = vld [vmem:[%s2041 + $0x20] sm:$0xf]
        %v2051 = vld [vmem:[%s2041 + $0x24] sm:$0xf]
        %v2052 = vld [vmem:[%s2041 + $0x28] sm:$0xf]
        %v2053 = vld [vmem:[%s2041 + $0x2c] sm:$0xf]
        %v2054 = vld [vmem:[%s2041 + $0x30] sm:$0xf]
        %v2055 = vld [vmem:[%s2041 + $0x34] sm:$0xf]
        %v2056 = vld [vmem:[%s2041 + $0x38] sm:$0xf]
        %v2057 = vld [vmem:[%s2041 + $0x3c] sm:$0xf]
        %v2058 = vld [vmem:[%s2041 + $0x40] sm:$0xf]
        %v2059 = vld [vmem:[%s2041 + $0x44] sm:$0xf]
        %v2060 = vld [vmem:[%s2041 + $0x48] sm:$0xf]
        %v2061 = vld [vmem:[%s2041 + $0x4c] sm:$0xf]
        %v2062 = vld [vmem:[%s2041 + $0x50] sm:$0xf]
        %v2063 = vld [vmem:[%s2041 + $0x54] sm:$0xf]
        %v2064 = vld [vmem:[%s2041 + $0x58] sm:$0xf]
        %v2065 = vld [vmem:[%s2041 + $0x5c] sm:$0xf]
        %v2066 = vld [vmem:[%s2041 + $0x60] sm:$0xf]
        %v2067 = vld [vmem:[%s2041 + $0x64] sm:$0xf]
        %v2068 = vld [vmem:[%s2041 + $0x68] sm:$0xf]
        %v2069 = vld [vmem:[%s2041 + $0x6c] sm:$0xf]
        %v2070 = vld [vmem:[%s2041 + $0x70] sm:$0xf]
        %v2071 = vld [vmem:[%s2041 + $0x74] sm:$0xf]
        %v2072 = vld [vmem:[%s2041 + $0x78] sm:$0xf]
        %v2073 = vld [vmem:[%s2041 + $0x7c] sm:$0xf]
        %v2106 = vunpack.c.l.b16 %v2042
        %v2107 = vunpack.c.l.b16 %v2043
        %v2108 = vunpack.c.l.b16 %v2044
        %v2109 = vunpack.c.l.b16 %v2045
        %v2110 = vunpack.c.l.b16 %v2046
        %v2111 = vunpack.c.l.b16 %v2047
        %v2112 = vunpack.c.l.b16 %v2048
        %v2113 = vunpack.c.l.b16 %v2049
        %v2114 = vunpack.c.l.b16 %v2050
        %v2115 = vunpack.c.l.b16 %v2051
        %v2116 = vunpack.c.l.b16 %v2052
        %v2117 = vunpack.c.l.b16 %v2053
        %v2118 = vunpack.c.l.b16 %v2054
        %v2119 = vunpack.c.l.b16 %v2055
        %v2120 = vunpack.c.l.b16 %v2056
        %v2121 = vunpack.c.l.b16 %v2057
        %v2122 = vunpack.c.l.b16 %v2058
        %v2123 = vunpack.c.l.b16 %v2059
        %v2124 = vunpack.c.l.b16 %v2060
        %v2125 = vunpack.c.l.b16 %v2061
        %v2126 = vunpack.c.l.b16 %v2062
        %v2127 = vunpack.c.l.b16 %v2063
        %v2128 = vunpack.c.l.b16 %v2064
        %v2129 = vunpack.c.l.b16 %v2065
        %v2130 = vunpack.c.l.b16 %v2066
        %v2131 = vunpack.c.l.b16 %v2067
        %v2132 = vunpack.c.l.b16 %v2068
        %v2133 = vunpack.c.l.b16 %v2069
        %v2134 = vunpack.c.l.b16 %v2070
        %v2135 = vunpack.c.l.b16 %v2071
        %v2136 = vunpack.c.l.b16 %v2072
        %v2137 = vunpack.c.l.b16 %v2073
        %v2138 = vpack.c.b16 %v2107, %v2106
        %v2139 = vpack.c.b16 %v2109, %v2108
        %v2140 = vpack.c.b16 %v2111, %v2110
        %v2141 = vpack.c.b16 %v2113, %v2112
        %v2142 = vpack.c.b16 %v2115, %v2114
        %v2143 = vpack.c.b16 %v2117, %v2116
        %v2144 = vpack.c.b16 %v2119, %v2118
        %v2145 = vpack.c.b16 %v2121, %v2120
        %v2146 = vpack.c.b16 %v2123, %v2122
        %v2147 = vpack.c.b16 %v2125, %v2124
        %v2148 = vpack.c.b16 %v2127, %v2126
        %v2149 = vpack.c.b16 %v2129, %v2128
        %v2150 = vpack.c.b16 %v2131, %v2130
        %v2151 = vpack.c.b16 %v2133, %v2132
        %v2152 = vpack.c.b16 %v2135, %v2134
        %v2153 = vpack.c.b16 %v2137, %v2136
        %2170 = vmatprep.subr.bf16.mxu0 0
        %2171 = vmatpush1.bf16.msra.mxu0 %v2138
        %2172 = vmatprep.subr.bf16.mxu0 0
        %2173 = vmatpush1.bf16.msra.mxu0 %v2139
        %2174 = vmatprep.subr.bf16.mxu0 0
        %2175 = vmatpush1.bf16.msra.mxu0 %v2140
        %2176 = vmatprep.subr.bf16.mxu0 0
        %2177 = vmatpush1.bf16.msra.mxu0 %v2141
        %2178 = vmatprep.subr.bf16.mxu0 0
        %2179 = vmatpush1.bf16.msra.mxu0 %v2142
        %2180 = vmatprep.subr.bf16.mxu0 0
        %2181 = vmatpush1.bf16.msra.mxu0 %v2143
        %2182 = vmatprep.subr.bf16.mxu0 0
        %2183 = vmatpush1.bf16.msra.mxu0 %v2144
        %2184 = vmatprep.subr.bf16.mxu0 0
        %2185 = vmatpush1.bf16.msra.mxu0 %v2145
        %2186 = vmatprep.subr.bf16.mxu0 0
        %2187 = vmatpush1.bf16.msra.mxu0 %v2146
        %2188 = vmatprep.subr.bf16.mxu0 0
        %2189 = vmatpush1.bf16.msra.mxu0 %v2147
        %2190 = vmatprep.subr.bf16.mxu0 0
        %2191 = vmatpush1.bf16.msra.mxu0 %v2148
        %2192 = vmatprep.subr.bf16.mxu0 0
        %2193 = vmatpush1.bf16.msra.mxu0 %v2149
        %2194 = vmatprep.subr.bf16.mxu0 0
        %2195 = vmatpush1.bf16.msra.mxu0 %v2150
        %2196 = vmatprep.subr.bf16.mxu0 0
        %2197 = vmatpush1.bf16.msra.mxu0 %v2151
        %2198 = vmatprep.subr.bf16.mxu0 0
        %2199 = vmatpush1.bf16.msra.mxu0 %v2152
        %2200 = vmatprep.subr.bf16.mxu0 0
        %2201 = vmatpush1.bf16.msra.mxu0 %v2153
        %2202 = vmatprep.mubr.bf16.mxu0 %v2038
        %2203 = vmatmul.mubr.bf16.gmra.mrb[0].mxu0 %v2037
        %v2204 = vpop.f32.mrb[0].mxu0
        %v2205 = vadd.f32 0.0, %v2204
        %v2206 = vpop.f32.mrb[0].mxu0
        %v2207 = vpop.f32.mrb[0].mxu0
        %v2208 = vadd.f32 0.0, %v2207
        %v2209 = vpop.f32.mrb[0].mxu0
        %2210 = vmatprep.mubr.bf16.mxu0 %v2040
        %2211 = vmatmul.mubr.bf16.gmra.mrb[0].mxu0 %v2039
        %v2212 = vpop.f32.mrb[0].mxu0
        %v2213 = vadd.f32 0.0, %v2212
        %v2214 = vpop.f32.mrb[0].mxu0
        %v2215 = vpop.f32.mrb[0].mxu0
        %v2216 = vadd.f32 0.0, %v2215
        %v2217 = vpop.f32.mrb[0].mxu0
        %2218 = vdwg.mxu0
        %v2219 = vpack.c.bf16 %v2208, %v2205
        %v2220 = vpack.c.bf16 %v2216, %v2213
        %v2221 = vshrl.u32 %v382, 16
        %v2222 = vpack.i.b16 %v2221, %v2221
        %v2224 = vlaneseq
        %v2225 = vshrl.u32 %v2224, 7
        %v2226 = vsub.s32 0, %v2225
        %v2227 = vrot.slane %v2222, %v2226
        %v2228 = vadd.bf16 %v2219, %v2227
        %v2229 = vadd.bf16 %v2220, %v2227
        %v2230 = vmax.bf16 %v2228, 0
        %v2231 = vmax.bf16 %v2229, 0
        %2234 = vrot.lane.b32.xlu0 %v2230, 64
        %v2235 = vpop.permute.xlu0 %2234
        %2236 = vrot.lane.b32.xlu0 %v2231, 64
        %v2237 = vpop.permute.xlu0 %2236
        %vm2238 = vcmask 523264
        %v2241 = vsel %vm2238, %v1507, %v2235
        %v2245 = vsel %vm2238, %v1508, %v2237
        %v2247 = vld [vmem:[%s4] sm:$0xff]
        %v2248 = vld [vmem:[%s4 + $0x8] sm:$0xff]
        %v2249 = vld [vmem:[%s4 + $0x10] sm:$0xff]
        %v2250 = vld [vmem:[%s4 + $0x18] sm:$0xff]
        %v2251 = vld [vmem:[%s4 + $0x20] sm:$0xff]
        %v2252 = vld [vmem:[%s4 + $0x28] sm:$0xff]
        %v2253 = vld [vmem:[%s4 + $0x30] sm:$0xff]
        %v2254 = vld [vmem:[%s4 + $0x38] sm:$0xff]
        %v2255 = vld [vmem:[%s4 + $0x40] sm:$0xff]
        %v2256 = vld [vmem:[%s4 + $0x48] sm:$0xff]
        %v2257 = vld [vmem:[%s4 + $0x50] sm:$0xff]
        %v2258 = vld [vmem:[%s4 + $0x58] sm:$0xff]
        %v2259 = vld [vmem:[%s4 + $0x60] sm:$0xff]
        %v2260 = vld [vmem:[%s4 + $0x68] sm:$0xff]
        %v2261 = vld [vmem:[%s4 + $0x70] sm:$0xff]
        %v2262 = vld [vmem:[%s4 + $0x78] sm:$0xff]
        %v2279 = vunpack.c.l.b16 %v2247
        %v2280 = vunpack.c.h.b16 %v2247
        %v2281 = vunpack.c.l.b16 %v2248
        %v2282 = vunpack.c.h.b16 %v2248
        %v2283 = vunpack.c.l.b16 %v2249
        %v2284 = vunpack.c.h.b16 %v2249
        %v2285 = vunpack.c.l.b16 %v2250
        %v2286 = vunpack.c.h.b16 %v2250
        %v2287 = vunpack.c.l.b16 %v2251
        %v2288 = vunpack.c.h.b16 %v2251
        %v2289 = vunpack.c.l.b16 %v2252
        %v2290 = vunpack.c.h.b16 %v2252
        %v2291 = vunpack.c.l.b16 %v2253
        %v2292 = vunpack.c.h.b16 %v2253
        %v2293 = vunpack.c.l.b16 %v2254
        %v2294 = vunpack.c.h.b16 %v2254
        %v2295 = vunpack.c.l.b16 %v2255
        %v2296 = vunpack.c.h.b16 %v2255
        %v2297 = vunpack.c.l.b16 %v2256
        %v2298 = vunpack.c.h.b16 %v2256
        %v2299 = vunpack.c.l.b16 %v2257
        %v2300 = vunpack.c.h.b16 %v2257
        %v2301 = vunpack.c.l.b16 %v2258
        %v2302 = vunpack.c.h.b16 %v2258
        %v2303 = vunpack.c.l.b16 %v2259
        %v2304 = vunpack.c.h.b16 %v2259
        %v2305 = vunpack.c.l.b16 %v2260
        %v2306 = vunpack.c.h.b16 %v2260
        %v2307 = vunpack.c.l.b16 %v2261
        %v2308 = vunpack.c.h.b16 %v2261
        %v2309 = vunpack.c.l.b16 %v2262
        %v2310 = vunpack.c.h.b16 %v2262
        %v2311 = vpack.c.b16 %v2281, %v2279
        %v2312 = vpack.c.b16 %v2282, %v2280
        %v2313 = vpack.c.b16 %v2285, %v2283
        %v2314 = vpack.c.b16 %v2286, %v2284
        %v2315 = vpack.c.b16 %v2289, %v2287
        %v2316 = vpack.c.b16 %v2290, %v2288
        %v2317 = vpack.c.b16 %v2293, %v2291
        %v2318 = vpack.c.b16 %v2294, %v2292
        %v2319 = vpack.c.b16 %v2297, %v2295
        %v2320 = vpack.c.b16 %v2298, %v2296
        %v2321 = vpack.c.b16 %v2301, %v2299
        %v2322 = vpack.c.b16 %v2302, %v2300
        %v2323 = vpack.c.b16 %v2305, %v2303
        %v2324 = vpack.c.b16 %v2306, %v2304
        %v2325 = vpack.c.b16 %v2309, %v2307
        %v2326 = vpack.c.b16 %v2310, %v2308
        %2343 = vmatprep.subr.bf16.mxu0 %v2312
        %2344 = vmatpush1.bf16.msra.mxu0 %v2311
        %2345 = vmatprep.subr.bf16.mxu0 %v2314
        %2346 = vmatpush1.bf16.msra.mxu0 %v2313
        %2347 = vmatprep.subr.bf16.mxu0 %v2316
        %2348 = vmatpush1.bf16.msra.mxu0 %v2315
        %2349 = vmatprep.subr.bf16.mxu0 %v2318
        %2350 = vmatpush1.bf16.msra.mxu0 %v2317
        %2351 = vmatprep.subr.bf16.mxu0 %v2320
        %2352 = vmatpush1.bf16.msra.mxu0 %v2319
        %2353 = vmatprep.subr.bf16.mxu0 %v2322
        %2354 = vmatpush1.bf16.msra.mxu0 %v2321
        %2355 = vmatprep.subr.bf16.mxu0 %v2324
        %2356 = vmatpush1.bf16.msra.mxu0 %v2323
        %2357 = vmatprep.subr.bf16.mxu0 %v2326
        %2358 = vmatpush1.bf16.msra.mxu0 %v2325
        %2359 = vmatprep.subr.bf16.mxu0 0
        %2360 = vmatpush1.bf16.msra.mxu0 0
        %2361 = vmatprep.subr.bf16.mxu0 0
        %2362 = vmatpush1.bf16.msra.mxu0 0
        %2363 = vmatprep.subr.bf16.mxu0 0
        %2364 = vmatpush1.bf16.msra.mxu0 0
        %2365 = vmatprep.subr.bf16.mxu0 0
        %2366 = vmatpush1.bf16.msra.mxu0 0
        %2367 = vmatprep.subr.bf16.mxu0 0
        %2368 = vmatpush1.bf16.msra.mxu0 0
        %2369 = vmatprep.subr.bf16.mxu0 0
        %2370 = vmatpush1.bf16.msra.mxu0 0
        %2371 = vmatprep.subr.bf16.mxu0 0
        %2372 = vmatpush1.bf16.msra.mxu0 0
        %2373 = vmatprep.subr.bf16.mxu0 0
        %2374 = vmatpush1.bf16.msra.mxu0 0
        %2375 = vmatprep.mubr.bf16.mxu0 0
        %2376 = vmatmul.mubr.bf16.gmra.mrb[0].mxu0 %v2241
        %v2377 = vpop.f32.mrb[0].mxu0
        %v2378 = vadd.f32 0.0, %v2377
        %v2379 = vpop.f32.mrb[0].mxu0
        %v2380 = vadd.f32 0.0, %v2379
        %v2381 = vpop.f32.mrb[0].mxu0
        %v2382 = vadd.f32 0.0, %v2381
        %v2383 = vpop.f32.mrb[0].mxu0
        %v2384 = vadd.f32 0.0, %v2383
        %2385 = vmatprep.mubr.bf16.mxu0 0
        %2386 = vmatmul.mubr.bf16.gmra.mrb[0].mxu0 %v2245
        %v2387 = vpop.f32.mrb[0].mxu0
        %v2388 = vadd.f32 0.0, %v2387
        %v2389 = vpop.f32.mrb[0].mxu0
        %v2390 = vadd.f32 0.0, %v2389
        %v2391 = vpop.f32.mrb[0].mxu0
        %v2392 = vadd.f32 0.0, %v2391
        %v2393 = vpop.f32.mrb[0].mxu0
        %v2394 = vadd.f32 0.0, %v2393
        %2395 = vdwg.mxu0
        %v2396 = vpack.c.bf16 %v2382, %v2378
        %v2397 = vpack.c.bf16 %v2384, %v2380
        %v2398 = vpack.c.bf16 %v2392, %v2388
        %v2399 = vpack.c.bf16 %v2394, %v2390
        %v2400 = vlaneseq
        %v2401 = vshrl.u32 %v2400, 7
        %v2402 = vsub.s32 2, %v2401
        %v2403 = vrot.slane %v1026, %v2402
        %v2404 = vlaneseq
        %v2405 = vshrl.u32 %v2404, 7
        %v2406 = vsub.s32 2, %v2405
        %v2407 = vrot.slane %v1033, %v2406
        %v2408 = vadd.bf16 %v2396, %v2403
        %v2409 = vadd.bf16 %v2397, %v2407
        %v2410 = vadd.bf16 %v2398, %v2403
        %v2411 = vadd.bf16 %v2399, %v2407
        %v2412 = vmax.bf16 %v2408, 0
        %v2413 = vmax.bf16 %v2409, 0
        %v2414 = vmax.bf16 %v2410, 0
        %v2415 = vmax.bf16 %v2411, 0
        %s2416 = scalar_lea.vmem %s3, 256
        %v2417 = vld [vmem:[%s2416] sm:$0xf]
        %v2418 = vld [vmem:[%s2416 + $0x4] sm:$0xf]
        %v2419 = vld [vmem:[%s2416 + $0x8] sm:$0xf]
        %v2420 = vld [vmem:[%s2416 + $0xc] sm:$0xf]
        %v2421 = vld [vmem:[%s2416 + $0x10] sm:$0xf]
        %v2422 = vld [vmem:[%s2416 + $0x14] sm:$0xf]
        %v2423 = vld [vmem:[%s2416 + $0x18] sm:$0xf]
        %v2424 = vld [vmem:[%s2416 + $0x1c] sm:$0xf]
        %v2425 = vld [vmem:[%s2416 + $0x20] sm:$0xf]
        %v2426 = vld [vmem:[%s2416 + $0x24] sm:$0xf]
        %v2427 = vld [vmem:[%s2416 + $0x28] sm:$0xf]
        %v2428 = vld [vmem:[%s2416 + $0x2c] sm:$0xf]
        %v2429 = vld [vmem:[%s2416 + $0x30] sm:$0xf]
        %v2430 = vld [vmem:[%s2416 + $0x34] sm:$0xf]
        %v2431 = vld [vmem:[%s2416 + $0x38] sm:$0xf]
        %v2432 = vld [vmem:[%s2416 + $0x3c] sm:$0xf]
        %v2433 = vld [vmem:[%s2416 + $0x40] sm:$0xf]
        %v2434 = vld [vmem:[%s2416 + $0x44] sm:$0xf]
        %v2435 = vld [vmem:[%s2416 + $0x48] sm:$0xf]
        %v2436 = vld [vmem:[%s2416 + $0x4c] sm:$0xf]
        %v2437 = vld [vmem:[%s2416 + $0x50] sm:$0xf]
        %v2438 = vld [vmem:[%s2416 + $0x54] sm:$0xf]
        %v2439 = vld [vmem:[%s2416 + $0x58] sm:$0xf]
        %v2440 = vld [vmem:[%s2416 + $0x5c] sm:$0xf]
        %v2441 = vld [vmem:[%s2416 + $0x60] sm:$0xf]
        %v2442 = vld [vmem:[%s2416 + $0x64] sm:$0xf]
        %v2443 = vld [vmem:[%s2416 + $0x68] sm:$0xf]
        %v2444 = vld [vmem:[%s2416 + $0x6c] sm:$0xf]
        %v2445 = vld [vmem:[%s2416 + $0x70] sm:$0xf]
        %v2446 = vld [vmem:[%s2416 + $0x74] sm:$0xf]
        %v2447 = vld [vmem:[%s2416 + $0x78] sm:$0xf]
        %v2448 = vld [vmem:[%s2416 + $0x7c] sm:$0xf]
        %v2481 = vunpack.c.l.b16 %v2417
        %v2482 = vunpack.c.l.b16 %v2418
        %v2483 = vunpack.c.l.b16 %v2419
        %v2484 = vunpack.c.l.b16 %v2420
        %v2485 = vunpack.c.l.b16 %v2421
        %v2486 = vunpack.c.l.b16 %v2422
        %v2487 = vunpack.c.l.b16 %v2423
        %v2488 = vunpack.c.l.b16 %v2424
        %v2489 = vunpack.c.l.b16 %v2425
        %v2490 = vunpack.c.l.b16 %v2426
        %v2491 = vunpack.c.l.b16 %v2427
        %v2492 = vunpack.c.l.b16 %v2428
        %v2493 = vunpack.c.l.b16 %v2429
        %v2494 = vunpack.c.l.b16 %v2430
        %v2495 = vunpack.c.l.b16 %v2431
        %v2496 = vunpack.c.l.b16 %v2432
        %v2497 = vunpack.c.l.b16 %v2433
        %v2498 = vunpack.c.l.b16 %v2434
        %v2499 = vunpack.c.l.b16 %v2435
        %v2500 = vunpack.c.l.b16 %v2436
        %v2501 = vunpack.c.l.b16 %v2437
        %v2502 = vunpack.c.l.b16 %v2438
        %v2503 = vunpack.c.l.b16 %v2439
        %v2504 = vunpack.c.l.b16 %v2440
        %v2505 = vunpack.c.l.b16 %v2441
        %v2506 = vunpack.c.l.b16 %v2442
        %v2507 = vunpack.c.l.b16 %v2443
        %v2508 = vunpack.c.l.b16 %v2444
        %v2509 = vunpack.c.l.b16 %v2445
        %v2510 = vunpack.c.l.b16 %v2446
        %v2511 = vunpack.c.l.b16 %v2447
        %v2512 = vunpack.c.l.b16 %v2448
        %v2513 = vpack.c.b16 %v2482, %v2481
        %v2514 = vpack.c.b16 %v2484, %v2483
        %v2515 = vpack.c.b16 %v2486, %v2485
        %v2516 = vpack.c.b16 %v2488, %v2487
        %v2517 = vpack.c.b16 %v2490, %v2489
        %v2518 = vpack.c.b16 %v2492, %v2491
        %v2519 = vpack.c.b16 %v2494, %v2493
        %v2520 = vpack.c.b16 %v2496, %v2495
        %v2521 = vpack.c.b16 %v2498, %v2497
        %v2522 = vpack.c.b16 %v2500, %v2499
        %v2523 = vpack.c.b16 %v2502, %v2501
        %v2524 = vpack.c.b16 %v2504, %v2503
        %v2525 = vpack.c.b16 %v2506, %v2505
        %v2526 = vpack.c.b16 %v2508, %v2507
        %v2527 = vpack.c.b16 %v2510, %v2509
        %v2528 = vpack.c.b16 %v2512, %v2511
        %2545 = vmatprep.subr.bf16.mxu0 0
        %2546 = vmatpush1.bf16.msra.mxu0 %v2513
        %2547 = vmatprep.subr.bf16.mxu0 0
        %2548 = vmatpush1.bf16.msra.mxu0 %v2514
        %2549 = vmatprep.subr.bf16.mxu0 0
        %2550 = vmatpush1.bf16.msra.mxu0 %v2515
        %2551 = vmatprep.subr.bf16.mxu0 0
        %2552 = vmatpush1.bf16.msra.mxu0 %v2516
        %2553 = vmatprep.subr.bf16.mxu0 0
        %2554 = vmatpush1.bf16.msra.mxu0 %v2517
        %2555 = vmatprep.subr.bf16.mxu0 0
        %2556 = vmatpush1.bf16.msra.mxu0 %v2518
        %2557 = vmatprep.subr.bf16.mxu0 0
        %2558 = vmatpush1.bf16.msra.mxu0 %v2519
        %2559 = vmatprep.subr.bf16.mxu0 0
        %2560 = vmatpush1.bf16.msra.mxu0 %v2520
        %2561 = vmatprep.subr.bf16.mxu0 0
        %2562 = vmatpush1.bf16.msra.mxu0 %v2521
        %2563 = vmatprep.subr.bf16.mxu0 0
        %2564 = vmatpush1.bf16.msra.mxu0 %v2522
        %2565 = vmatprep.subr.bf16.mxu0 0
        %2566 = vmatpush1.bf16.msra.mxu0 %v2523
        %2567 = vmatprep.subr.bf16.mxu0 0
        %2568 = vmatpush1.bf16.msra.mxu0 %v2524
        %2569 = vmatprep.subr.bf16.mxu0 0
        %2570 = vmatpush1.bf16.msra.mxu0 %v2525
        %2571 = vmatprep.subr.bf16.mxu0 0
        %2572 = vmatpush1.bf16.msra.mxu0 %v2526
        %2573 = vmatprep.subr.bf16.mxu0 0
        %2574 = vmatpush1.bf16.msra.mxu0 %v2527
        %2575 = vmatprep.subr.bf16.mxu0 0
        %2576 = vmatpush1.bf16.msra.mxu0 %v2528
        %2577 = vmatprep.mubr.bf16.mxu0 %v2413
        %2578 = vmatmul.mubr.bf16.gmra.mrb[0].mxu0 %v2412
        %v2579 = vpop.f32.mrb[0].mxu0
        %v2580 = vadd.f32 0.0, %v2579
        %v2581 = vpop.f32.mrb[0].mxu0
        %v2582 = vpop.f32.mrb[0].mxu0
        %v2583 = vadd.f32 0.0, %v2582
        %v2584 = vpop.f32.mrb[0].mxu0
        %2585 = vmatprep.mubr.bf16.mxu0 %v2415
        %2586 = vmatmul.mubr.bf16.gmra.mrb[0].mxu0 %v2414
        %v2587 = vpop.f32.mrb[0].mxu0
        %v2588 = vadd.f32 0.0, %v2587
        %v2589 = vpop.f32.mrb[0].mxu0
        %v2590 = vpop.f32.mrb[0].mxu0
        %v2591 = vadd.f32 0.0, %v2590
        %v2592 = vpop.f32.mrb[0].mxu0
        %2593 = vdwg.mxu0
        %v2594 = vpack.c.bf16 %v2583, %v2580
        %v2595 = vpack.c.bf16 %v2591, %v2588
        %v2596 = vlaneseq
        %v2597 = vshrl.u32 %v2596, 7
        %v2598 = vsub.s32 1, %v2597
        %v2599 = vrot.slane %v1499, %v2598
        %v2600 = vadd.bf16 %v2594, %v2599
        %v2601 = vadd.bf16 %v2595, %v2599
        %v2602 = vmax.bf16 %v2600, 0
        %v2603 = vmax.bf16 %v2601, 0
        %v2604 = vld [vmem:[%s5] sm:$0xf]
        %v2605 = vld [vmem:[%s5 + $0x4] sm:$0xf]
        %v2606 = vld [vmem:[%s5 + $0x8] sm:$0xf]
        %v2607 = vld [vmem:[%s5 + $0xc] sm:$0xf]
        %v2608 = vld [vmem:[%s5 + $0x10] sm:$0xf]
        %v2609 = vld [vmem:[%s5 + $0x14] sm:$0xf]
        %v2610 = vld [vmem:[%s5 + $0x18] sm:$0xf]
        %v2611 = vld [vmem:[%s5 + $0x1c] sm:$0xf]
        %v2612 = vld [vmem:[%s9] sm:$0x1]
        %v2614 = vlaneseq
        %v2615 = vshrl.u32 %v2614, 7
        %v2616 = vsub.s32 0, %v2615
        %v2617 = vrot.slane %v2612, %v2616
        %v2627 = vunpack.c.l.b16 %v2604
        %v2628 = vunpack.c.l.b16 %v2605
        %v2629 = vunpack.c.l.b16 %v2606
        %v2630 = vunpack.c.l.b16 %v2607
        %v2631 = vunpack.c.l.b16 %v2608
        %v2632 = vunpack.c.l.b16 %v2609
        %v2633 = vunpack.c.l.b16 %v2610
        %v2634 = vunpack.c.l.b16 %v2611
        %v2635 = vpack.c.b16 %v2628, %v2627
        %v2636 = vpack.c.b16 %v2630, %v2629
        %v2637 = vpack.c.b16 %v2632, %v2631
        %v2638 = vpack.c.b16 %v2634, %v2633
        %v2644 = vsel %vm2238, %v2602, 0
        %v2647 = vsel %vm2238, %v2603, 0
        %2649 = vmatprep.subr.bf16.mxu0 0
        %2650 = vmatpush1.bf16.msra.mxu0 %v2635
        %2651 = vmatprep.subr.bf16.mxu0 0
        %2652 = vmatpush1.bf16.msra.mxu0 %v2636
        %2653 = vmatprep.subr.bf16.mxu0 0
        %2654 = vmatpush1.bf16.msra.mxu0 %v2637
        %2655 = vmatprep.subr.bf16.mxu0 0
        %2656 = vmatpush1.bf16.msra.mxu0 %v2638
        %2657 = vmatprep.subr.bf16.mxu0 0
        %2658 = vmatpush1.bf16.msra.mxu0 0
        %2659 = vmatprep.subr.bf16.mxu0 0
        %2660 = vmatpush1.bf16.msra.mxu0 0
        %2661 = vmatprep.subr.bf16.mxu0 0
        %2662 = vmatpush1.bf16.msra.mxu0 0
        %2663 = vmatprep.subr.bf16.mxu0 0
        %2664 = vmatpush1.bf16.msra.mxu0 0
        %2665 = vmatprep.subr.bf16.mxu0 0
        %2666 = vmatpush1.bf16.msra.mxu0 0
        %2667 = vmatprep.subr.bf16.mxu0 0
        %2668 = vmatpush1.bf16.msra.mxu0 0
        %2669 = vmatprep.subr.bf16.mxu0 0
        %2670 = vmatpush1.bf16.msra.mxu0 0
        %2671 = vmatprep.subr.bf16.mxu0 0
        %2672 = vmatpush1.bf16.msra.mxu0 0
        %2673 = vmatprep.subr.bf16.mxu0 0
        %2674 = vmatpush1.bf16.msra.mxu0 0
        %2675 = vmatprep.subr.bf16.mxu0 0
        %2676 = vmatpush1.bf16.msra.mxu0 0
        %2677 = vmatprep.subr.bf16.mxu0 0
        %2678 = vmatpush1.bf16.msra.mxu0 0
        %2679 = vmatprep.subr.bf16.mxu0 0
        %2680 = vmatpush1.bf16.msra.mxu0 0
        %2681 = vmatprep.mubr.bf16.mxu0 0
        %2682 = vmatmul.mubr.bf16.gmra.mrb[0].mxu0 %v2644
        %v2683 = vpop.f32.mrb[0].mxu0
        %v2684 = vadd.f32 %v2617, %v2683
        %v2685 = vpop.f32.mrb[0].mxu0
        %v2686 = vpop.f32.mrb[0].mxu0
        %v2687 = vadd.f32 %v2617, %v2686
        %v2688 = vpop.f32.mrb[0].mxu0
        %2689 = vmatprep.mubr.bf16.mxu0 0
        %2690 = vmatmul.mubr.bf16.gmra.mrb[0].mxu0 %v2647
        %v2691 = vpop.f32.mrb[0].mxu0
        %v2692 = vadd.f32 %v2617, %v2691
        %v2693 = vpop.f32.mrb[0].mxu0
        %v2694 = vpop.f32.mrb[0].mxu0
        %v2695 = vadd.f32 %v2617, %v2694
        %v2696 = vpop.f32.mrb[0].mxu0
        %2697 = vdwg.mxu0
        %2698 = vst [vmem:[%s368] sm:$0xff] %v2684
        %2699 = vst [vmem:[%s368 + $0x8] sm:$0xff] %v2687
        %2700 = vst [vmem:[%s368 + $0x10] sm:$0xff] %v2692
        %2701 = vst [vmem:[%s368 + $0x18] sm:$0xff] %v2695
        %s2702 = sand.u32 %s248, 1
        %s2703 = scalar_lea.sflag [#allocation4], %s2702
        %s2704 = sand.u32 %s248, 1
        %s2705 = smul.addr %s2704, 32
        %s2706 = scalar_lea.vmem [#allocation5], %s2705
        // Predicated region
        $region65: #{tpu_custom_call.1} parent=59 // pred_check
          %p2707 = pneg %p258
        $region66: #{tpu_custom_call.1} parent=59 // pred_check_branch
          %2709 = sbr.rel (%p2707) target = $region68
        $region67: #{tpu_custom_call.1} parent=59 // pred_region
          %s2710 = smul.u32 4, %s25
          %s2712 = ssub.s32 512, 512
          %2713 = vsyncadd %s2703, %s2712
          %s2714 = smul.addr %s2710, 128
          %s2715 = scalar_lea.hbm %s10, %s2714
          %s2716 = sshll.u32 %s2706, 4
          %s2717 = int_to_ptr.vmem [resolvable:$true] %s2716
          %2722 = dma.vmem_to_hbm [thread:$0]  %s2717, 512, %s2715, %s2703, 128, 128, 8
        $region68: #{tpu_custom_call.1} parent=59 // pred_fallthru
          _
      $region60: #{tpu_custom_call.1} parent=5 // pred_fallthru
        _
      %p2723 = scmp.le.s32.totalorder 2, %s20
      // Predicated region
      $region69: #{tpu_custom_call.1} parent=5 // pred_check
        %p2724 = pneg %p2723
      $region70: #{tpu_custom_call.1} parent=5 // pred_check_branch
        %2726 = sbr.rel (%p2724) target = $region72
      $region71: #{tpu_custom_call.1} parent=5 // pred_region
        %s2727 = ssub.s32 %s20, 2
        // Predicated region
        $region73: #{tpu_custom_call.1} parent=71 // pred_check
          %p2728 = pneg %p264
        $region74: #{tpu_custom_call.1} parent=71 // pred_check_branch
          %2730 = sbr.rel (%p2728) target = $region76
        $region75: #{tpu_custom_call.1} parent=71 // pred_region
          %s2731 = sand.u32 %s249, 1
          %s2732 = scalar_lea.sflag [#allocation4], %s2731
          %s2733 = sand.u32 %s249, 1
          %s2734 = smul.addr %s2733, 32
          %s2735 = scalar_lea.vmem [#allocation5], %s2734
          %2736 = dma.done %s2732, 512
        $region76: #{tpu_custom_call.1} parent=71 // pred_fallthru
          _
      $region72: #{tpu_custom_call.1} parent=5 // pred_fallthru
        _
    $region6: #{tpu_custom_call.1} parent=1 // loop_footer
      %s24 = sadd.s32 1, %s20
    $region7: #{tpu_custom_call.1} parent=1 // loop_footer_branch
      %19 = sbr.rel target = $region3
    $region8: #{tpu_custom_call.1} parent=1 // loop_exit
      _
    %2737 = vsyncpa [#allocation3], 1
    %s2738 = scalar_lea.sflag [#allocation3], 1
    %2739 = vsyncpa %s2738, 1
    %2740 = vsyncpa [#allocation4], 1
    %s2741 = scalar_lea.sflag [#allocation4], 1
    %2742 = vsyncpa %s2741, 1

</llo_original>
